<compile_context>
chip_gen: v5e
topology: v5e:2x2
jax: 0.10.0
libtpu: 0.0.40
codegen_flags: <defaults>
</compile_context>

<pallas_src>
import jax
import jax.numpy as jnp
from jax.experimental import pallas as pl
from jax.experimental.pallas import tpu as pltpu

# ----------------------------- model config ---------------------------------
VOCAB = 100          # tiny synthetic vocab
MAX_POS = 32
D = 64               # hidden dim  (DistilBERT "dim")
H = 2                # attention heads
DH = D // H          # per-head dim
FFN = 128            # hidden_dim of FFN
N_LAYERS = 2
NUM_CLASSES = 2
LOGIT_PAD = 128      # lane-dense padded logits width
LN_EPS = 1e-12


# --------------------------- in-kernel helpers -------------------------------
def _gelu_tanh(x):
    # TODO(synk): HF DistilBERT uses exact erf-GELU; tanh approximation used
    # here to guarantee Mosaic lowering (negligible numeric difference).
    c = jnp.float32(0.7978845608028654)  # sqrt(2/pi)
    return 0.5 * x * (1.0 + jnp.tanh(c * (x + 0.044715 * x * x * x)))


def _layernorm(x, g, b):
    mu = jnp.mean(x, axis=-1, keepdims=True)
    var = jnp.mean((x - mu) * (x - mu), axis=-1, keepdims=True)
    inv = jax.lax.rsqrt(var + LN_EPS)
    return (x - mu) * inv * g + b


def _attention(qkv, mask_bias, bt, s):
    """qkv: [BT*S, 3D] f32 (packed heads); mask_bias: [BT, 1, S] f32 -> [BT*S, D]."""
    qkv3 = qkv.reshape(bt, s, 3 * D)
    scale = jnp.float32(1.0 / (DH ** 0.5))
    ctx_heads = []
    # TODO(synk): at real D/H replace this static head loop (fine at H=2, D=64)
    # with a single head-batched dot_general on a [BT*H, S, DH] layout.
    for h in range(H):                                 # static unroll (H = 2)
        q = qkv3[:, :, h * DH:(h + 1) * DH]
        k = qkv3[:, :, D + h * DH:D + (h + 1) * DH]
        v = qkv3[:, :, 2 * D + h * DH:2 * D + (h + 1) * DH]
        scores = jnp.einsum(
            'bqd,bkd->bqk',
            q.astype(jnp.bfloat16), k.astype(jnp.bfloat16),
            preferred_element_type=jnp.float32) * scale
        scores = scores + mask_bias                    # broadcast over query rows
        scores = scores - jnp.max(scores, axis=-1, keepdims=True)
        e = jnp.exp(scores)
        p = e * pl.reciprocal(jnp.sum(e, axis=-1, keepdims=True), approx=True)
        ctx_heads.append(jnp.einsum(
            'bqk,bkd->bqd',
            p.astype(jnp.bfloat16), v.astype(jnp.bfloat16),
            preferred_element_type=jnp.float32))
    ctx = jnp.concatenate(ctx_heads, axis=-1)          # [BT, S, D]
    return ctx.reshape(bt * s, D)


# ------------------------------ fused kernel ---------------------------------
def fused_forward_kernel(x_ref, mbias_ref,
                         eg_ref, eb_ref,
                         qkv_w_ref, qkv_b_ref, o_w_ref, o_b_ref,
                         ln1_g_ref, ln1_b_ref,
                         ff1_w_ref, ff1_b_ref, ff2_w_ref, ff2_b_ref,
                         ln2_g_ref, ln2_b_ref,
                         pre_w_ref, pre_b_ref, out_w_ref, out_b_ref,
                         o_ref):
    """One batch tile per grid step. x_ref: [BT*S, D] bf16, mbias_ref: [BT, 1, S]."""
    bt, s = mbias_ref.shape[0], mbias_ref.shape[2]
    x = x_ref[...].astype(jnp.float32)                 # folded rows [BT*S, D], f32
    mb = mbias_ref[...]                                # [BT, 1, S]

    # Embedding LayerNorm.
    x = _layernorm(x, eg_ref[...], eb_ref[...])

    # Transformer layers (static unroll over N_LAYERS).
    for l in range(N_LAYERS):
        # Fused QKV projection on folded rows: [BT*S, D] @ [D, 3D] (bf16 -> f32 acc)
        qkv = jnp.dot(x.astype(jnp.bfloat16), qkv_w_ref[l],
                      preferred_element_type=jnp.float32) + qkv_b_ref[l]
        ctx = _attention(qkv, mb, bt, s)               # [BT*S, D]
        sa = jnp.dot(ctx.astype(jnp.bfloat16), o_w_ref[l],
                     preferred_element_type=jnp.float32) + o_b_ref[l]
        x = _layernorm(sa + x, ln1_g_ref[l], ln1_b_ref[l])

        h1 = jnp.dot(x.astype(jnp.bfloat16), ff1_w_ref[l],
                     preferred_element_type=jnp.float32) + ff1_b_ref[l]
        h1 = _gelu_tanh(h1)
        h2 = jnp.dot(h1.astype(jnp.bfloat16), ff2_w_ref[l],
                     preferred_element_type=jnp.float32) + ff2_b_ref[l]
        x = _layernorm(h2 + x, ln2_g_ref[l], ln2_b_ref[l])

    # Classifier head (dropout = identity), CLS rows only: [BT, D].
    cls = x.reshape(bt, s, D)[:, 0, :]
    hh = jnp.dot(cls.astype(jnp.bfloat16), pre_w_ref[...],
                 preferred_element_type=jnp.float32) + pre_b_ref[...]
    hh = jnp.maximum(hh, 0.0)
    logits = jnp.dot(hh.astype(jnp.bfloat16), out_w_ref[...],
                     preferred_element_type=jnp.float32) + out_b_ref[...]
    o_ref[...] = logits.astype(o_ref.dtype)            # lane-dense [BT, 128]


def _replicated_spec(shape):
    """Full-array block, same block for every grid step (loaded once)."""
    nd = len(shape)
    return pl.BlockSpec(shape, lambda t, _nd=nd: (0,) * _nd)


def _pick_batch_tile(batch, seq, target_rows=128):
    """Largest divisor of `batch` with tile_rows = BT*S close to >=128."""
    bt = max(1, min(batch, max(1, target_rows // max(seq, 1))))
    while batch % bt:
        bt -= 1
    return bt


# ------------------------------- model forward -------------------------------
def distilbert_forward(params, input_ids, attention_mask):
    B, S = input_ids.shape
    BT = _pick_batch_tile(B, S)
    n_tiles = B // BT

    # Embedding gather stays in plain JAX.
    # TODO(synk): fuse the gather via PrefetchScalarGridSpec + pl.Element row
    # gather on word_emb once the kernel is HBM-bound on weights.
    x_emb = params["word_emb"][input_ids] + \
        params["pos_emb"][jnp.arange(S)][None, :, :]             # [B, S, D] f32
    x_rows = x_emb.reshape(B * S, D).astype(jnp.bfloat16)        # folded rows

    # Additive key-mask bias: 0 where mask==1, -1e9 where mask==0.  [B, 1, S]
    mbias = ((attention_mask.astype(jnp.float32) - 1.0) * 1e9)[:, None, :]

    # Lane-dense padded classifier weights (zero columns beyond NUM_CLASSES).
    out_w_pad = jnp.pad(params["out_w"], ((0, 0), (0, LOGIT_PAD - NUM_CLASSES)))
    out_b_pad = jnp.pad(params["out_b"], ((0, 0), (0, LOGIT_PAD - NUM_CLASSES)))

    bf16 = lambda a: a.astype(jnp.bfloat16)   # matmul operands only; biases/LN stay f32
    weights = (
        params["emb_ln_g"], params["emb_ln_b"],
        bf16(params["qkv_w"]), params["qkv_b"], bf16(params["o_w"]), params["o_b"],
        params["ln1_g"], params["ln1_b"],
        bf16(params["ff1_w"]), params["ff1_b"], bf16(params["ff2_w"]), params["ff2_b"],
        params["ln2_g"], params["ln2_b"],
        bf16(params["pre_w"]), params["pre_b"], bf16(out_w_pad), out_b_pad,
    )

    in_specs = [
        pl.BlockSpec((BT * S, D), lambda t: (t, 0)),      # folded activations
        pl.BlockSpec((BT, 1, S), lambda t: (t, 0, 0)),    # mask bias
    ] + [_replicated_spec(w.shape) for w in weights]

    logits_slab = pl.pallas_call(
        fused_forward_kernel,
        out_shape=jax.ShapeDtypeStruct((n_tiles, BT, LOGIT_PAD), jnp.float32),
        grid=(n_tiles,),
        in_specs=in_specs,
        out_specs=pl.BlockSpec((None, BT, LOGIT_PAD), lambda t: (t, 0, 0)),
        compiler_params=pltpu.CompilerParams(
            dimension_semantics=("parallel",),
            vmem_limit_bytes=32 * 1024 * 1024),
    )(x_rows, mbias, *weights)

    # Row 0 of each sample is the CLS token; first NUM_CLASSES lanes are real logits.
    return logits_slab.reshape(B, LOGIT_PAD)[:, :NUM_CLASSES]


# ------------------------------ parameter init -------------------------------
def init_params(key):
    keys = iter(jax.random.split(key, 64))

    def w(shape, scale=0.02):
        return jax.random.normal(next(keys), shape, jnp.float32) * scale

    def zeros(shape):
        return jnp.zeros(shape, jnp.float32)

    def ones(shape):
        return jnp.ones(shape, jnp.float32)

    L = N_LAYERS
    return dict(
        word_emb=w((VOCAB, D)),
        pos_emb=w((MAX_POS, D)),
        emb_ln_g=ones((1, D)), emb_ln_b=zeros((1, D)),
        # Per-layer weights stacked along a leading layer axis; Q/K/V fused.
        qkv_w=w((L, D, 3 * D)), qkv_b=zeros((L, 1, 3 * D)),
        o_w=w((L, D, D)), o_b=zeros((L, 1, D)),
        ln1_g=ones((L, 1, D)), ln1_b=zeros((L, 1, D)),
        ff1_w=w((L, D, FFN)), ff1_b=zeros((L, 1, FFN)),
        ff2_w=w((L, FFN, D)), ff2_b=zeros((L, 1, D)),
        ln2_g=ones((L, 1, D)), ln2_b=zeros((L, 1, D)),
        # Classifier head.
        pre_w=w((D, D)), pre_b=zeros((1, D)),
        out_w=w((D, NUM_CLASSES)), out_b=zeros((1, NUM_CLASSES)),
    )


# ----------------------------------- main ------------------------------------
if __name__ == "__main__":
    key = jax.random.PRNGKey(0)
    pk, ik = jax.random.split(key)

    params = init_params(pk)

    B, S = 2, 8
    input_ids = jax.random.randint(ik, (B, S), 0, VOCAB, dtype=jnp.int32)
    attention_mask = jnp.ones((B, S), jnp.int32)
    attention_mask = attention_mask.at[1, -2:].set(0)   # pad last 2 tokens of sample 1

    fwd = jax.jit(distilbert_forward)
    logits = fwd(params, input_ids, attention_mask)
    jax.block_until_ready(logits)

    assert logits.shape == (B, NUM_CLASSES)
    assert bool(jnp.all(jnp.isfinite(logits)))
    print("KERNEL_OK")
</pallas_src>

<mosaic_0001>
module attributes {stable_mosaic.version = 11 : i64} {
  func.func @fused_forward_kernel(%arg0: i32, %arg1: memref<16x64xbf16, #tpu.memory_space<vmem>>, %arg2: memref<2x1x8xf32, #tpu.memory_space<vmem>>, %arg3: memref<1x64xf32, #tpu.memory_space<vmem>>, %arg4: memref<1x64xf32, #tpu.memory_space<vmem>>, %arg5: memref<2x64x192xbf16, #tpu.memory_space<vmem>>, %arg6: memref<2x1x192xf32, #tpu.memory_space<vmem>>, %arg7: memref<2x64x64xbf16, #tpu.memory_space<vmem>>, %arg8: memref<2x1x64xf32, #tpu.memory_space<vmem>>, %arg9: memref<2x1x64xf32, #tpu.memory_space<vmem>>, %arg10: memref<2x1x64xf32, #tpu.memory_space<vmem>>, %arg11: memref<2x64x128xbf16, #tpu.memory_space<vmem>>, %arg12: memref<2x1x128xf32, #tpu.memory_space<vmem>>, %arg13: memref<2x128x64xbf16, #tpu.memory_space<vmem>>, %arg14: memref<2x1x64xf32, #tpu.memory_space<vmem>>, %arg15: memref<2x1x64xf32, #tpu.memory_space<vmem>>, %arg16: memref<2x1x64xf32, #tpu.memory_space<vmem>>, %arg17: memref<64x64xbf16, #tpu.memory_space<vmem>>, %arg18: memref<1x64xf32, #tpu.memory_space<vmem>>, %arg19: memref<64x128xbf16, #tpu.memory_space<vmem>>, %arg20: memref<1x128xf32, #tpu.memory_space<vmem>>, %arg21: memref<1x2x128xf32, #tpu.memory_space<vmem>>) attributes {dimension_semantics = [#tpu.dimension_semantics<parallel>], iteration_bounds = array<i64: 1>, scalar_prefetch = 0 : i64, scratch_operands = 0 : i64, tpu.core_type = #tpu.core_type<tc>, window_params = [{transform_indices = @transform_0, window_bounds = array<i64: 16, 64>}, {transform_indices = @transform_1, window_bounds = array<i64: 2, 1, 8>}, {pipeline_mode = #tpu.pipeline_mode<synchronous>, transform_indices = @transform_2, window_bounds = array<i64: 1, 64>}, {pipeline_mode = #tpu.pipeline_mode<synchronous>, transform_indices = @transform_3, window_bounds = array<i64: 1, 64>}, {pipeline_mode = #tpu.pipeline_mode<synchronous>, transform_indices = @transform_4, window_bounds = array<i64: 2, 64, 192>}, {pipeline_mode = #tpu.pipeline_mode<synchronous>, transform_indices = @transform_5, window_bounds = array<i64: 2, 1, 192>}, {pipeline_mode = #tpu.pipeline_mode<synchronous>, transform_indices = @transform_6, window_bounds = array<i64: 2, 64, 64>}, {pipeline_mode = #tpu.pipeline_mode<synchronous>, transform_indices = @transform_7, window_bounds = array<i64: 2, 1, 64>}, {pipeline_mode = #tpu.pipeline_mode<synchronous>, transform_indices = @transform_8, window_bounds = array<i64: 2, 1, 64>}, {pipeline_mode = #tpu.pipeline_mode<synchronous>, transform_indices = @transform_9, window_bounds = array<i64: 2, 1, 64>}, {pipeline_mode = #tpu.pipeline_mode<synchronous>, transform_indices = @transform_10, window_bounds = array<i64: 2, 64, 128>}, {pipeline_mode = #tpu.pipeline_mode<synchronous>, transform_indices = @transform_11, window_bounds = array<i64: 2, 1, 128>}, {pipeline_mode = #tpu.pipeline_mode<synchronous>, transform_indices = @transform_12, window_bounds = array<i64: 2, 128, 64>}, {pipeline_mode = #tpu.pipeline_mode<synchronous>, transform_indices = @transform_13, window_bounds = array<i64: 2, 1, 64>}, {pipeline_mode = #tpu.pipeline_mode<synchronous>, transform_indices = @transform_14, window_bounds = array<i64: 2, 1, 64>}, {pipeline_mode = #tpu.pipeline_mode<synchronous>, transform_indices = @transform_15, window_bounds = array<i64: 2, 1, 64>}, {pipeline_mode = #tpu.pipeline_mode<synchronous>, transform_indices = @transform_16, window_bounds = array<i64: 64, 64>}, {pipeline_mode = #tpu.pipeline_mode<synchronous>, transform_indices = @transform_17, window_bounds = array<i64: 1, 64>}, {pipeline_mode = #tpu.pipeline_mode<synchronous>, transform_indices = @transform_18, window_bounds = array<i64: 64, 128>}, {pipeline_mode = #tpu.pipeline_mode<synchronous>, transform_indices = @transform_19, window_bounds = array<i64: 1, 128>}, {transform_indices = @transform_20, window_bounds = array<i64: 1, 2, 128>}]} {
    %c0 = arith.constant 0 : index
    %c0_0 = arith.constant 0 : index
    %0 = vector.load %arg1[%c0, %c0_0] : memref<16x64xbf16, #tpu.memory_space<vmem>>, vector<16x64xbf16>
    %1 = arith.extf %0 : vector<16x64xbf16> to vector<16x64xf32>
    %c0_1 = arith.constant 0 : index
    %c0_2 = arith.constant 0 : index
    %c0_3 = arith.constant 0 : index
    %2 = vector.load %arg2[%c0_1, %c0_2, %c0_3] : memref<2x1x8xf32, #tpu.memory_space<vmem>>, vector<2x1x8xf32>
    %c0_4 = arith.constant 0 : index
    %c0_5 = arith.constant 0 : index
    %3 = vector.load %arg3[%c0_4, %c0_5] : memref<1x64xf32, #tpu.memory_space<vmem>>, vector<1x64xf32>
    %c0_6 = arith.constant 0 : index
    %c0_7 = arith.constant 0 : index
    %4 = vector.load %arg4[%c0_6, %c0_7] : memref<1x64xf32, #tpu.memory_space<vmem>>, vector<1x64xf32>
    %cst = arith.constant dense<0.000000e+00> : vector<16xf32>
    %5 = vector.multi_reduction <add>, %1, %cst [1] : vector<16x64xf32> to vector<16xf32>
    %6 = vector.shape_cast %5 : vector<16xf32> to vector<16x1xf32>
    %cst_8 = arith.constant 6.400000e+01 : f32
    %7 = vector.broadcast %cst_8 : f32 to vector<16x1xf32>
    %8 = arith.divf %6, %7 : vector<16x1xf32>
    %9 = vector.broadcast %8 : vector<16x1xf32> to vector<16x64xf32>
    %10 = arith.subf %1, %9 : vector<16x64xf32>
    %11 = vector.broadcast %8 : vector<16x1xf32> to vector<16x64xf32>
    %12 = arith.subf %1, %11 : vector<16x64xf32>
    %13 = arith.mulf %10, %12 : vector<16x64xf32>
    %cst_9 = arith.constant dense<0.000000e+00> : vector<16xf32>
    %14 = vector.multi_reduction <add>, %13, %cst_9 [1] : vector<16x64xf32> to vector<16xf32>
    %15 = vector.shape_cast %14 : vector<16xf32> to vector<16x1xf32>
    %cst_10 = arith.constant 6.400000e+01 : f32
    %16 = vector.broadcast %cst_10 : f32 to vector<16x1xf32>
    %17 = arith.divf %15, %16 : vector<16x1xf32>
    %cst_11 = arith.constant 9.99999996E-13 : f32
    %18 = vector.broadcast %cst_11 : f32 to vector<16x1xf32>
    %19 = arith.addf %17, %18 : vector<16x1xf32>
    %20 = math.rsqrt %19 : vector<16x1xf32>
    %21 = vector.broadcast %8 : vector<16x1xf32> to vector<16x64xf32>
    %22 = arith.subf %1, %21 : vector<16x64xf32>
    %23 = vector.broadcast %20 : vector<16x1xf32> to vector<16x64xf32>
    %24 = arith.mulf %22, %23 : vector<16x64xf32>
    %25 = vector.broadcast %3 : vector<1x64xf32> to vector<16x64xf32>
    %26 = arith.mulf %24, %25 : vector<16x64xf32>
    %27 = vector.broadcast %4 : vector<1x64xf32> to vector<16x64xf32>
    %28 = arith.addf %26, %27 : vector<16x64xf32>
    %29 = arith.truncf %28 : vector<16x64xf32> to vector<16x64xbf16>
    %c0_12 = arith.constant 0 : index
    %c0_13 = arith.constant 0 : index
    %c0_14 = arith.constant 0 : index
    %30 = vector.load %arg5[%c0_12, %c0_13, %c0_14] : memref<2x64x192xbf16, #tpu.memory_space<vmem>>, vector<1x64x192xbf16>
    %31 = vector.shape_cast %30 : vector<1x64x192xbf16> to vector<64x192xbf16>
    %cst_15 = arith.constant dense<0.000000e+00> : vector<16x192xf32>
    %32 = tpu.matmul %29, %31, %cst_15 {dimension_numbers = #tpu.dot_dimension_numbers<[1], [0], [0], [1], [0, 0, 1, 1], [], []>} : vector<16x64xbf16>, vector<64x192xbf16>, vector<16x192xf32> -> vector<16x192xf32>
    %c0_16 = arith.constant 0 : index
    %c0_17 = arith.constant 0 : index
    %c0_18 = arith.constant 0 : index
    %33 = vector.load %arg6[%c0_16, %c0_17, %c0_18] : memref<2x1x192xf32, #tpu.memory_space<vmem>>, vector<1x1x192xf32>
    %34 = vector.shape_cast %33 : vector<1x1x192xf32> to vector<1x192xf32>
    %35 = vector.broadcast %34 : vector<1x192xf32> to vector<16x192xf32>
    %36 = arith.addf %32, %35 : vector<16x192xf32>
    %37 = vector.shape_cast %36 : vector<16x192xf32> to vector<2x8x192xf32>
    %38 = vector.extract_strided_slice %37 {offsets = [0, 0, 0], sizes = [2, 8, 32], strides = [1, 1, 1]} : vector<2x8x192xf32> to vector<2x8x32xf32>
    %39 = vector.extract_strided_slice %37 {offsets = [0, 0, 64], sizes = [2, 8, 32], strides = [1, 1, 1]} : vector<2x8x192xf32> to vector<2x8x32xf32>
    %40 = vector.extract_strided_slice %37 {offsets = [0, 0, 128], sizes = [2, 8, 32], strides = [1, 1, 1]} : vector<2x8x192xf32> to vector<2x8x32xf32>
    %41 = arith.truncf %38 : vector<2x8x32xf32> to vector<2x8x32xbf16>
    %42 = arith.truncf %39 : vector<2x8x32xf32> to vector<2x8x32xbf16>
    "tpu.trace_start"() <{level = 10 : i32, message = "bqd,bkd->bqk"}> : () -> ()
    %cst_19 = arith.constant dense<0.000000e+00> : vector<2x8x8xf32>
    %43 = tpu.matmul %41, %42, %cst_19 {dimension_numbers = #tpu.dot_dimension_numbers<[2], [2], [1], [1], [0, 0, 0, 1, 1, 1], [0], [0]>} : vector<2x8x32xbf16>, vector<2x8x32xbf16>, vector<2x8x8xf32> -> vector<2x8x8xf32>
    "tpu.trace_stop"() : () -> ()
    %cst_20 = arith.constant 0.176776692 : f32
    %44 = vector.broadcast %cst_20 : f32 to vector<2x8x8xf32>
    %45 = arith.mulf %43, %44 : vector<2x8x8xf32>
    %46 = vector.broadcast %2 : vector<2x1x8xf32> to vector<2x8x8xf32>
    %47 = arith.addf %45, %46 : vector<2x8x8xf32>
    %cst_21 = arith.constant dense<0xFF800000> : vector<2x8xf32>
    %48 = vector.multi_reduction <maximumf>, %47, %cst_21 [2] : vector<2x8x8xf32> to vector<2x8xf32>
    %49 = vector.shape_cast %48 : vector<2x8xf32> to vector<2x8x1xf32>
    %50 = vector.broadcast %49 : vector<2x8x1xf32> to vector<2x8x8xf32>
    %51 = arith.subf %47, %50 : vector<2x8x8xf32>
    %52 = math.exp %51 : vector<2x8x8xf32>
    %cst_22 = arith.constant dense<0.000000e+00> : vector<2x8xf32>
    %53 = vector.multi_reduction <add>, %52, %cst_22 [2] : vector<2x8x8xf32> to vector<2x8xf32>
    %54 = vector.shape_cast %53 : vector<2x8xf32> to vector<2x8x1xf32>
    %55 = tpu.reciprocal %54 {approx = true} : vector<2x8x1xf32> -> vector<2x8x1xf32>
    %56 = vector.broadcast %55 : vector<2x8x1xf32> to vector<2x8x8xf32>
    %57 = arith.mulf %52, %56 : vector<2x8x8xf32>
    %58 = arith.truncf %57 : vector<2x8x8xf32> to vector<2x8x8xbf16>
    %59 = arith.truncf %40 : vector<2x8x32xf32> to vector<2x8x32xbf16>
    "tpu.trace_start"() <{level = 10 : i32, message = "bqk,bkd->bqd"}> : () -> ()
    %cst_23 = arith.constant dense<0.000000e+00> : vector<2x8x32xf32>
    %60 = tpu.matmul %58, %59, %cst_23 {dimension_numbers = #tpu.dot_dimension_numbers<[2], [1], [1], [2], [0, 0, 0, 1, 1, 2], [0], [0]>} : vector<2x8x8xbf16>, vector<2x8x32xbf16>, vector<2x8x32xf32> -> vector<2x8x32xf32>
    "tpu.trace_stop"() : () -> ()
    %61 = vector.extract_strided_slice %37 {offsets = [0, 0, 32], sizes = [2, 8, 32], strides = [1, 1, 1]} : vector<2x8x192xf32> to vector<2x8x32xf32>
    %62 = vector.extract_strided_slice %37 {offsets = [0, 0, 96], sizes = [2, 8, 32], strides = [1, 1, 1]} : vector<2x8x192xf32> to vector<2x8x32xf32>
    %63 = vector.extract_strided_slice %37 {offsets = [0, 0, 160], sizes = [2, 8, 32], strides = [1, 1, 1]} : vector<2x8x192xf32> to vector<2x8x32xf32>
    %64 = arith.truncf %61 : vector<2x8x32xf32> to vector<2x8x32xbf16>
    %65 = arith.truncf %62 : vector<2x8x32xf32> to vector<2x8x32xbf16>
    "tpu.trace_start"() <{level = 10 : i32, message = "bqd,bkd->bqk"}> : () -> ()
    %cst_24 = arith.constant dense<0.000000e+00> : vector<2x8x8xf32>
    %66 = tpu.matmul %64, %65, %cst_24 {dimension_numbers = #tpu.dot_dimension_numbers<[2], [2], [1], [1], [0, 0, 0, 1, 1, 1], [0], [0]>} : vector<2x8x32xbf16>, vector<2x8x32xbf16>, vector<2x8x8xf32> -> vector<2x8x8xf32>
    "tpu.trace_stop"() : () -> ()
    %cst_25 = arith.constant 0.176776692 : f32
    %67 = vector.broadcast %cst_25 : f32 to vector<2x8x8xf32>
    %68 = arith.mulf %66, %67 : vector<2x8x8xf32>
    %69 = vector.broadcast %2 : vector<2x1x8xf32> to vector<2x8x8xf32>
    %70 = arith.addf %68, %69 : vector<2x8x8xf32>
    %cst_26 = arith.constant dense<0xFF800000> : vector<2x8xf32>
    %71 = vector.multi_reduction <maximumf>, %70, %cst_26 [2] : vector<2x8x8xf32> to vector<2x8xf32>
    %72 = vector.shape_cast %71 : vector<2x8xf32> to vector<2x8x1xf32>
    %73 = vector.broadcast %72 : vector<2x8x1xf32> to vector<2x8x8xf32>
    %74 = arith.subf %70, %73 : vector<2x8x8xf32>
    %75 = math.exp %74 : vector<2x8x8xf32>
    %cst_27 = arith.constant dense<0.000000e+00> : vector<2x8xf32>
    %76 = vector.multi_reduction <add>, %75, %cst_27 [2] : vector<2x8x8xf32> to vector<2x8xf32>
    %77 = vector.shape_cast %76 : vector<2x8xf32> to vector<2x8x1xf32>
    %78 = tpu.reciprocal %77 {approx = true} : vector<2x8x1xf32> -> vector<2x8x1xf32>
    %79 = vector.broadcast %78 : vector<2x8x1xf32> to vector<2x8x8xf32>
    %80 = arith.mulf %75, %79 : vector<2x8x8xf32>
    %81 = arith.truncf %80 : vector<2x8x8xf32> to vector<2x8x8xbf16>
    %82 = arith.truncf %63 : vector<2x8x32xf32> to vector<2x8x32xbf16>
    "tpu.trace_start"() <{level = 10 : i32, message = "bqk,bkd->bqd"}> : () -> ()
    %cst_28 = arith.constant dense<0.000000e+00> : vector<2x8x32xf32>
    %83 = tpu.matmul %81, %82, %cst_28 {dimension_numbers = #tpu.dot_dimension_numbers<[2], [1], [1], [2], [0, 0, 0, 1, 1, 2], [0], [0]>} : vector<2x8x8xbf16>, vector<2x8x32xbf16>, vector<2x8x32xf32> -> vector<2x8x32xf32>
    "tpu.trace_stop"() : () -> ()
    %84 = tpu.concatenate %60, %83 in 2 : vector<2x8x32xf32>, vector<2x8x32xf32> -> vector<2x8x64xf32>
    %85 = vector.shape_cast %84 : vector<2x8x64xf32> to vector<16x64xf32>
    %86 = arith.truncf %85 : vector<16x64xf32> to vector<16x64xbf16>
    %c0_29 = arith.constant 0 : index
    %c0_30 = arith.constant 0 : index
    %c0_31 = arith.constant 0 : index
    %87 = vector.load %arg7[%c0_29, %c0_30, %c0_31] : memref<2x64x64xbf16, #tpu.memory_space<vmem>>, vector<1x64x64xbf16>
    %88 = vector.shape_cast %87 : vector<1x64x64xbf16> to vector<64x64xbf16>
    %cst_32 = arith.constant dense<0.000000e+00> : vector<16x64xf32>
    %89 = tpu.matmul %86, %88, %cst_32 {dimension_numbers = #tpu.dot_dimension_numbers<[1], [0], [0], [1], [0, 0, 1, 1], [], []>} : vector<16x64xbf16>, vector<64x64xbf16>, vector<16x64xf32> -> vector<16x64xf32>
    %c0_33 = arith.constant 0 : index
    %c0_34 = arith.constant 0 : index
    %c0_35 = arith.constant 0 : index
    %90 = vector.load %arg8[%c0_33, %c0_34, %c0_35] : memref<2x1x64xf32, #tpu.memory_space<vmem>>, vector<1x1x64xf32>
    %91 = vector.shape_cast %90 : vector<1x1x64xf32> to vector<1x64xf32>
    %92 = vector.broadcast %91 : vector<1x64xf32> to vector<16x64xf32>
    %93 = arith.addf %89, %92 : vector<16x64xf32>
    %94 = arith.addf %93, %28 : vector<16x64xf32>
    %c0_36 = arith.constant 0 : index
    %c0_37 = arith.constant 0 : index
    %c0_38 = arith.constant 0 : index
    %95 = vector.load %arg9[%c0_36, %c0_37, %c0_38] : memref<2x1x64xf32, #tpu.memory_space<vmem>>, vector<1x1x64xf32>
    %96 = vector.shape_cast %95 : vector<1x1x64xf32> to vector<1x64xf32>
    %c0_39 = arith.constant 0 : index
    %c0_40 = arith.constant 0 : index
    %c0_41 = arith.constant 0 : index
    %97 = vector.load %arg10[%c0_39, %c0_40, %c0_41] : memref<2x1x64xf32, #tpu.memory_space<vmem>>, vector<1x1x64xf32>
    %98 = vector.shape_cast %97 : vector<1x1x64xf32> to vector<1x64xf32>
    %cst_42 = arith.constant dense<0.000000e+00> : vector<16xf32>
    %99 = vector.multi_reduction <add>, %94, %cst_42 [1] : vector<16x64xf32> to vector<16xf32>
    %100 = vector.shape_cast %99 : vector<16xf32> to vector<16x1xf32>
    %cst_43 = arith.constant 6.400000e+01 : f32
    %101 = vector.broadcast %cst_43 : f32 to vector<16x1xf32>
    %102 = arith.divf %100, %101 : vector<16x1xf32>
    %103 = vector.broadcast %102 : vector<16x1xf32> to vector<16x64xf32>
    %104 = arith.subf %94, %103 : vector<16x64xf32>
    %105 = vector.broadcast %102 : vector<16x1xf32> to vector<16x64xf32>
    %106 = arith.subf %94, %105 : vector<16x64xf32>
    %107 = arith.mulf %104, %106 : vector<16x64xf32>
    %cst_44 = arith.constant dense<0.000000e+00> : vector<16xf32>
    %108 = vector.multi_reduction <add>, %107, %cst_44 [1] : vector<16x64xf32> to vector<16xf32>
    %109 = vector.shape_cast %108 : vector<16xf32> to vector<16x1xf32>
    %cst_45 = arith.constant 6.400000e+01 : f32
    %110 = vector.broadcast %cst_45 : f32 to vector<16x1xf32>
    %111 = arith.divf %109, %110 : vector<16x1xf32>
    %cst_46 = arith.constant 9.99999996E-13 : f32
    %112 = vector.broadcast %cst_46 : f32 to vector<16x1xf32>
    %113 = arith.addf %111, %112 : vector<16x1xf32>
    %114 = math.rsqrt %113 : vector<16x1xf32>
    %115 = vector.broadcast %102 : vector<16x1xf32> to vector<16x64xf32>
    %116 = arith.subf %94, %115 : vector<16x64xf32>
    %117 = vector.broadcast %114 : vector<16x1xf32> to vector<16x64xf32>
    %118 = arith.mulf %116, %117 : vector<16x64xf32>
    %119 = vector.broadcast %96 : vector<1x64xf32> to vector<16x64xf32>
    %120 = arith.mulf %118, %119 : vector<16x64xf32>
    %121 = vector.broadcast %98 : vector<1x64xf32> to vector<16x64xf32>
    %122 = arith.addf %120, %121 : vector<16x64xf32>
    %123 = arith.truncf %122 : vector<16x64xf32> to vector<16x64xbf16>
    %c0_47 = arith.constant 0 : index
    %c0_48 = arith.constant 0 : index
    %c0_49 = arith.constant 0 : index
    %124 = vector.load %arg11[%c0_47, %c0_48, %c0_49] : memref<2x64x128xbf16, #tpu.memory_space<vmem>>, vector<1x64x128xbf16>
    %125 = vector.shape_cast %124 : vector<1x64x128xbf16> to vector<64x128xbf16>
    %cst_50 = arith.constant dense<0.000000e+00> : vector<16x128xf32>
    %126 = tpu.matmul %123, %125, %cst_50 {dimension_numbers = #tpu.dot_dimension_numbers<[1], [0], [0], [1], [0, 0, 1, 1], [], []>} : vector<16x64xbf16>, vector<64x128xbf16>, vector<16x128xf32> -> vector<16x128xf32>
    %c0_51 = arith.constant 0 : index
    %c0_52 = arith.constant 0 : index
    %c0_53 = arith.constant 0 : index
    %127 = vector.load %arg12[%c0_51, %c0_52, %c0_53] : memref<2x1x128xf32, #tpu.memory_space<vmem>>, vector<1x1x128xf32>
    %128 = vector.shape_cast %127 : vector<1x1x128xf32> to vector<1x128xf32>
    %129 = vector.broadcast %128 : vector<1x128xf32> to vector<16x128xf32>
    %130 = arith.addf %126, %129 : vector<16x128xf32>
    %cst_54 = arith.constant 5.000000e-01 : f32
    %131 = vector.broadcast %cst_54 : f32 to vector<16x128xf32>
    %132 = arith.mulf %131, %130 : vector<16x128xf32>
    %cst_55 = arith.constant 4.471500e-02 : f32
    %133 = vector.broadcast %cst_55 : f32 to vector<16x128xf32>
    %134 = arith.mulf %133, %130 : vector<16x128xf32>
    %135 = arith.mulf %134, %130 : vector<16x128xf32>
    %136 = arith.mulf %135, %130 : vector<16x128xf32>
    %137 = arith.addf %130, %136 : vector<16x128xf32>
    %cst_56 = arith.constant 0.797884583 : f32
    %138 = vector.broadcast %cst_56 : f32 to vector<16x128xf32>
    %139 = arith.mulf %138, %137 : vector<16x128xf32>
    %140 = math.tanh %139 : vector<16x128xf32>
    %cst_57 = arith.constant 1.000000e+00 : f32
    %141 = vector.broadcast %cst_57 : f32 to vector<16x128xf32>
    %142 = arith.addf %141, %140 : vector<16x128xf32>
    %143 = arith.mulf %132, %142 : vector<16x128xf32>
    %144 = arith.truncf %143 : vector<16x128xf32> to vector<16x128xbf16>
    %c0_58 = arith.constant 0 : index
    %c0_59 = arith.constant 0 : index
    %c0_60 = arith.constant 0 : index
    %145 = vector.load %arg13[%c0_58, %c0_59, %c0_60] : memref<2x128x64xbf16, #tpu.memory_space<vmem>>, vector<1x128x64xbf16>
    %146 = vector.shape_cast %145 : vector<1x128x64xbf16> to vector<128x64xbf16>
    %cst_61 = arith.constant dense<0.000000e+00> : vector<16x64xf32>
    %147 = tpu.matmul %144, %146, %cst_61 {dimension_numbers = #tpu.dot_dimension_numbers<[1], [0], [0], [1], [0, 0, 1, 1], [], []>} : vector<16x128xbf16>, vector<128x64xbf16>, vector<16x64xf32> -> vector<16x64xf32>
    %c0_62 = arith.constant 0 : index
    %c0_63 = arith.constant 0 : index
    %c0_64 = arith.constant 0 : index
    %148 = vector.load %arg14[%c0_62, %c0_63, %c0_64] : memref<2x1x64xf32, #tpu.memory_space<vmem>>, vector<1x1x64xf32>
    %149 = vector.shape_cast %148 : vector<1x1x64xf32> to vector<1x64xf32>
    %150 = vector.broadcast %149 : vector<1x64xf32> to vector<16x64xf32>
    %151 = arith.addf %147, %150 : vector<16x64xf32>
    %152 = arith.addf %151, %122 : vector<16x64xf32>
    %c0_65 = arith.constant 0 : index
    %c0_66 = arith.constant 0 : index
    %c0_67 = arith.constant 0 : index
    %153 = vector.load %arg15[%c0_65, %c0_66, %c0_67] : memref<2x1x64xf32, #tpu.memory_space<vmem>>, vector<1x1x64xf32>
    %154 = vector.shape_cast %153 : vector<1x1x64xf32> to vector<1x64xf32>
    %c0_68 = arith.constant 0 : index
    %c0_69 = arith.constant 0 : index
    %c0_70 = arith.constant 0 : index
    %155 = vector.load %arg16[%c0_68, %c0_69, %c0_70] : memref<2x1x64xf32, #tpu.memory_space<vmem>>, vector<1x1x64xf32>
    %156 = vector.shape_cast %155 : vector<1x1x64xf32> to vector<1x64xf32>
    %cst_71 = arith.constant dense<0.000000e+00> : vector<16xf32>
    %157 = vector.multi_reduction <add>, %152, %cst_71 [1] : vector<16x64xf32> to vector<16xf32>
    %158 = vector.shape_cast %157 : vector<16xf32> to vector<16x1xf32>
    %cst_72 = arith.constant 6.400000e+01 : f32
    %159 = vector.broadcast %cst_72 : f32 to vector<16x1xf32>
    %160 = arith.divf %158, %159 : vector<16x1xf32>
    %161 = vector.broadcast %160 : vector<16x1xf32> to vector<16x64xf32>
    %162 = arith.subf %152, %161 : vector<16x64xf32>
    %163 = vector.broadcast %160 : vector<16x1xf32> to vector<16x64xf32>
    %164 = arith.subf %152, %163 : vector<16x64xf32>
    %165 = arith.mulf %162, %164 : vector<16x64xf32>
    %cst_73 = arith.constant dense<0.000000e+00> : vector<16xf32>
    %166 = vector.multi_reduction <add>, %165, %cst_73 [1] : vector<16x64xf32> to vector<16xf32>
    %167 = vector.shape_cast %166 : vector<16xf32> to vector<16x1xf32>
    %cst_74 = arith.constant 6.400000e+01 : f32
    %168 = vector.broadcast %cst_74 : f32 to vector<16x1xf32>
    %169 = arith.divf %167, %168 : vector<16x1xf32>
    %cst_75 = arith.constant 9.99999996E-13 : f32
    %170 = vector.broadcast %cst_75 : f32 to vector<16x1xf32>
    %171 = arith.addf %169, %170 : vector<16x1xf32>
    %172 = math.rsqrt %171 : vector<16x1xf32>
    %173 = vector.broadcast %160 : vector<16x1xf32> to vector<16x64xf32>
    %174 = arith.subf %152, %173 : vector<16x64xf32>
    %175 = vector.broadcast %172 : vector<16x1xf32> to vector<16x64xf32>
    %176 = arith.mulf %174, %175 : vector<16x64xf32>
    %177 = vector.broadcast %154 : vector<1x64xf32> to vector<16x64xf32>
    %178 = arith.mulf %176, %177 : vector<16x64xf32>
    %179 = vector.broadcast %156 : vector<1x64xf32> to vector<16x64xf32>
    %180 = arith.addf %178, %179 : vector<16x64xf32>
    %181 = arith.truncf %180 : vector<16x64xf32> to vector<16x64xbf16>
    %c1 = arith.constant 1 : index
    %c0_76 = arith.constant 0 : index
    %c0_77 = arith.constant 0 : index
    %182 = vector.load %arg5[%c1, %c0_76, %c0_77] : memref<2x64x192xbf16, #tpu.memory_space<vmem>>, vector<1x64x192xbf16>
    %183 = vector.shape_cast %182 : vector<1x64x192xbf16> to vector<64x192xbf16>
    %cst_78 = arith.constant dense<0.000000e+00> : vector<16x192xf32>
    %184 = tpu.matmul %181, %183, %cst_78 {dimension_numbers = #tpu.dot_dimension_numbers<[1], [0], [0], [1], [0, 0, 1, 1], [], []>} : vector<16x64xbf16>, vector<64x192xbf16>, vector<16x192xf32> -> vector<16x192xf32>
    %c1_79 = arith.constant 1 : index
    %c0_80 = arith.constant 0 : index
    %c0_81 = arith.constant 0 : index
    %185 = vector.load %arg6[%c1_79, %c0_80, %c0_81] : memref<2x1x192xf32, #tpu.memory_space<vmem>>, vector<1x1x192xf32>
    %186 = vector.shape_cast %185 : vector<1x1x192xf32> to vector<1x192xf32>
    %187 = vector.broadcast %186 : vector<1x192xf32> to vector<16x192xf32>
    %188 = arith.addf %184, %187 : vector<16x192xf32>
    %189 = vector.shape_cast %188 : vector<16x192xf32> to vector<2x8x192xf32>
    %190 = vector.extract_strided_slice %189 {offsets = [0, 0, 0], sizes = [2, 8, 32], strides = [1, 1, 1]} : vector<2x8x192xf32> to vector<2x8x32xf32>
    %191 = vector.extract_strided_slice %189 {offsets = [0, 0, 64], sizes = [2, 8, 32], strides = [1, 1, 1]} : vector<2x8x192xf32> to vector<2x8x32xf32>
    %192 = vector.extract_strided_slice %189 {offsets = [0, 0, 128], sizes = [2, 8, 32], strides = [1, 1, 1]} : vector<2x8x192xf32> to vector<2x8x32xf32>
    %193 = arith.truncf %190 : vector<2x8x32xf32> to vector<2x8x32xbf16>
    %194 = arith.truncf %191 : vector<2x8x32xf32> to vector<2x8x32xbf16>
    "tpu.trace_start"() <{level = 10 : i32, message = "bqd,bkd->bqk"}> : () -> ()
    %cst_82 = arith.constant dense<0.000000e+00> : vector<2x8x8xf32>
    %195 = tpu.matmul %193, %194, %cst_82 {dimension_numbers = #tpu.dot_dimension_numbers<[2], [2], [1], [1], [0, 0, 0, 1, 1, 1], [0], [0]>} : vector<2x8x32xbf16>, vector<2x8x32xbf16>, vector<2x8x8xf32> -> vector<2x8x8xf32>
    "tpu.trace_stop"() : () -> ()
    %cst_83 = arith.constant 0.176776692 : f32
    %196 = vector.broadcast %cst_83 : f32 to vector<2x8x8xf32>
    %197 = arith.mulf %195, %196 : vector<2x8x8xf32>
    %198 = vector.broadcast %2 : vector<2x1x8xf32> to vector<2x8x8xf32>
    %199 = arith.addf %197, %198 : vector<2x8x8xf32>
    %cst_84 = arith.constant dense<0xFF800000> : vector<2x8xf32>
    %200 = vector.multi_reduction <maximumf>, %199, %cst_84 [2] : vector<2x8x8xf32> to vector<2x8xf32>
    %201 = vector.shape_cast %200 : vector<2x8xf32> to vector<2x8x1xf32>
    %202 = vector.broadcast %201 : vector<2x8x1xf32> to vector<2x8x8xf32>
    %203 = arith.subf %199, %202 : vector<2x8x8xf32>
    %204 = math.exp %203 : vector<2x8x8xf32>
    %cst_85 = arith.constant dense<0.000000e+00> : vector<2x8xf32>
    %205 = vector.multi_reduction <add>, %204, %cst_85 [2] : vector<2x8x8xf32> to vector<2x8xf32>
    %206 = vector.shape_cast %205 : vector<2x8xf32> to vector<2x8x1xf32>
    %207 = tpu.reciprocal %206 {approx = true} : vector<2x8x1xf32> -> vector<2x8x1xf32>
    %208 = vector.broadcast %207 : vector<2x8x1xf32> to vector<2x8x8xf32>
    %209 = arith.mulf %204, %208 : vector<2x8x8xf32>
    %210 = arith.truncf %209 : vector<2x8x8xf32> to vector<2x8x8xbf16>
    %211 = arith.truncf %192 : vector<2x8x32xf32> to vector<2x8x32xbf16>
    "tpu.trace_start"() <{level = 10 : i32, message = "bqk,bkd->bqd"}> : () -> ()
    %cst_86 = arith.constant dense<0.000000e+00> : vector<2x8x32xf32>
    %212 = tpu.matmul %210, %211, %cst_86 {dimension_numbers = #tpu.dot_dimension_numbers<[2], [1], [1], [2], [0, 0, 0, 1, 1, 2], [0], [0]>} : vector<2x8x8xbf16>, vector<2x8x32xbf16>, vector<2x8x32xf32> -> vector<2x8x32xf32>
    "tpu.trace_stop"() : () -> ()
    %213 = vector.extract_strided_slice %189 {offsets = [0, 0, 32], sizes = [2, 8, 32], strides = [1, 1, 1]} : vector<2x8x192xf32> to vector<2x8x32xf32>
    %214 = vector.extract_strided_slice %189 {offsets = [0, 0, 96], sizes = [2, 8, 32], strides = [1, 1, 1]} : vector<2x8x192xf32> to vector<2x8x32xf32>
    %215 = vector.extract_strided_slice %189 {offsets = [0, 0, 160], sizes = [2, 8, 32], strides = [1, 1, 1]} : vector<2x8x192xf32> to vector<2x8x32xf32>
    %216 = arith.truncf %213 : vector<2x8x32xf32> to vector<2x8x32xbf16>
    %217 = arith.truncf %214 : vector<2x8x32xf32> to vector<2x8x32xbf16>
    "tpu.trace_start"() <{level = 10 : i32, message = "bqd,bkd->bqk"}> : () -> ()
    %cst_87 = arith.constant dense<0.000000e+00> : vector<2x8x8xf32>
    %218 = tpu.matmul %216, %217, %cst_87 {dimension_numbers = #tpu.dot_dimension_numbers<[2], [2], [1], [1], [0, 0, 0, 1, 1, 1], [0], [0]>} : vector<2x8x32xbf16>, vector<2x8x32xbf16>, vector<2x8x8xf32> -> vector<2x8x8xf32>
    "tpu.trace_stop"() : () -> ()
    %cst_88 = arith.constant 0.176776692 : f32
    %219 = vector.broadcast %cst_88 : f32 to vector<2x8x8xf32>
    %220 = arith.mulf %218, %219 : vector<2x8x8xf32>
    %221 = vector.broadcast %2 : vector<2x1x8xf32> to vector<2x8x8xf32>
    %222 = arith.addf %220, %221 : vector<2x8x8xf32>
    %cst_89 = arith.constant dense<0xFF800000> : vector<2x8xf32>
    %223 = vector.multi_reduction <maximumf>, %222, %cst_89 [2] : vector<2x8x8xf32> to vector<2x8xf32>
    %224 = vector.shape_cast %223 : vector<2x8xf32> to vector<2x8x1xf32>
    %225 = vector.broadcast %224 : vector<2x8x1xf32> to vector<2x8x8xf32>
    %226 = arith.subf %222, %225 : vector<2x8x8xf32>
    %227 = math.exp %226 : vector<2x8x8xf32>
    %cst_90 = arith.constant dense<0.000000e+00> : vector<2x8xf32>
    %228 = vector.multi_reduction <add>, %227, %cst_90 [2] : vector<2x8x8xf32> to vector<2x8xf32>
    %229 = vector.shape_cast %228 : vector<2x8xf32> to vector<2x8x1xf32>
    %230 = tpu.reciprocal %229 {approx = true} : vector<2x8x1xf32> -> vector<2x8x1xf32>
    %231 = vector.broadcast %230 : vector<2x8x1xf32> to vector<2x8x8xf32>
    %232 = arith.mulf %227, %231 : vector<2x8x8xf32>
    %233 = arith.truncf %232 : vector<2x8x8xf32> to vector<2x8x8xbf16>
    %234 = arith.truncf %215 : vector<2x8x32xf32> to vector<2x8x32xbf16>
    "tpu.trace_start"() <{level = 10 : i32, message = "bqk,bkd->bqd"}> : () -> ()
    %cst_91 = arith.constant dense<0.000000e+00> : vector<2x8x32xf32>
    %235 = tpu.matmul %233, %234, %cst_91 {dimension_numbers = #tpu.dot_dimension_numbers<[2], [1], [1], [2], [0, 0, 0, 1, 1, 2], [0], [0]>} : vector<2x8x8xbf16>, vector<2x8x32xbf16>, vector<2x8x32xf32> -> vector<2x8x32xf32>
    "tpu.trace_stop"() : () -> ()
    %236 = tpu.concatenate %212, %235 in 2 : vector<2x8x32xf32>, vector<2x8x32xf32> -> vector<2x8x64xf32>
    %237 = vector.shape_cast %236 : vector<2x8x64xf32> to vector<16x64xf32>
    %238 = arith.truncf %237 : vector<16x64xf32> to vector<16x64xbf16>
    %c1_92 = arith.constant 1 : index
    %c0_93 = arith.constant 0 : index
    %c0_94 = arith.constant 0 : index
    %239 = vector.load %arg7[%c1_92, %c0_93, %c0_94] : memref<2x64x64xbf16, #tpu.memory_space<vmem>>, vector<1x64x64xbf16>
    %240 = vector.shape_cast %239 : vector<1x64x64xbf16> to vector<64x64xbf16>
    %cst_95 = arith.constant dense<0.000000e+00> : vector<16x64xf32>
    %241 = tpu.matmul %238, %240, %cst_95 {dimension_numbers = #tpu.dot_dimension_numbers<[1], [0], [0], [1], [0, 0, 1, 1], [], []>} : vector<16x64xbf16>, vector<64x64xbf16>, vector<16x64xf32> -> vector<16x64xf32>
    %c1_96 = arith.constant 1 : index
    %c0_97 = arith.constant 0 : index
    %c0_98 = arith.constant 0 : index
    %242 = vector.load %arg8[%c1_96, %c0_97, %c0_98] : memref<2x1x64xf32, #tpu.memory_space<vmem>>, vector<1x1x64xf32>
    %243 = vector.shape_cast %242 : vector<1x1x64xf32> to vector<1x64xf32>
    %244 = vector.broadcast %243 : vector<1x64xf32> to vector<16x64xf32>
    %245 = arith.addf %241, %244 : vector<16x64xf32>
    %246 = arith.addf %245, %180 : vector<16x64xf32>
    %c1_99 = arith.constant 1 : index
    %c0_100 = arith.constant 0 : index
    %c0_101 = arith.constant 0 : index
    %247 = vector.load %arg9[%c1_99, %c0_100, %c0_101] : memref<2x1x64xf32, #tpu.memory_space<vmem>>, vector<1x1x64xf32>
    %248 = vector.shape_cast %247 : vector<1x1x64xf32> to vector<1x64xf32>
    %c1_102 = arith.constant 1 : index
    %c0_103 = arith.constant 0 : index
    %c0_104 = arith.constant 0 : index
    %249 = vector.load %arg10[%c1_102, %c0_103, %c0_104] : memref<2x1x64xf32, #tpu.memory_space<vmem>>, vector<1x1x64xf32>
    %250 = vector.shape_cast %249 : vector<1x1x64xf32> to vector<1x64xf32>
    %cst_105 = arith.constant dense<0.000000e+00> : vector<16xf32>
    %251 = vector.multi_reduction <add>, %246, %cst_105 [1] : vector<16x64xf32> to vector<16xf32>
    %252 = vector.shape_cast %251 : vector<16xf32> to vector<16x1xf32>
    %cst_106 = arith.constant 6.400000e+01 : f32
    %253 = vector.broadcast %cst_106 : f32 to vector<16x1xf32>
    %254 = arith.divf %252, %253 : vector<16x1xf32>
    %255 = vector.broadcast %254 : vector<16x1xf32> to vector<16x64xf32>
    %256 = arith.subf %246, %255 : vector<16x64xf32>
    %257 = vector.broadcast %254 : vector<16x1xf32> to vector<16x64xf32>
    %258 = arith.subf %246, %257 : vector<16x64xf32>
    %259 = arith.mulf %256, %258 : vector<16x64xf32>
    %cst_107 = arith.constant dense<0.000000e+00> : vector<16xf32>
    %260 = vector.multi_reduction <add>, %259, %cst_107 [1] : vector<16x64xf32> to vector<16xf32>
    %261 = vector.shape_cast %260 : vector<16xf32> to vector<16x1xf32>
    %cst_108 = arith.constant 6.400000e+01 : f32
    %262 = vector.broadcast %cst_108 : f32 to vector<16x1xf32>
    %263 = arith.divf %261, %262 : vector<16x1xf32>
    %cst_109 = arith.constant 9.99999996E-13 : f32
    %264 = vector.broadcast %cst_109 : f32 to vector<16x1xf32>
    %265 = arith.addf %263, %264 : vector<16x1xf32>
    %266 = math.rsqrt %265 : vector<16x1xf32>
    %267 = vector.broadcast %254 : vector<16x1xf32> to vector<16x64xf32>
    %268 = arith.subf %246, %267 : vector<16x64xf32>
    %269 = vector.broadcast %266 : vector<16x1xf32> to vector<16x64xf32>
    %270 = arith.mulf %268, %269 : vector<16x64xf32>
    %271 = vector.broadcast %248 : vector<1x64xf32> to vector<16x64xf32>
    %272 = arith.mulf %270, %271 : vector<16x64xf32>
    %273 = vector.broadcast %250 : vector<1x64xf32> to vector<16x64xf32>
    %274 = arith.addf %272, %273 : vector<16x64xf32>
    %275 = arith.truncf %274 : vector<16x64xf32> to vector<16x64xbf16>
    %c1_110 = arith.constant 1 : index
    %c0_111 = arith.constant 0 : index
    %c0_112 = arith.constant 0 : index
    %276 = vector.load %arg11[%c1_110, %c0_111, %c0_112] : memref<2x64x128xbf16, #tpu.memory_space<vmem>>, vector<1x64x128xbf16>
    %277 = vector.shape_cast %276 : vector<1x64x128xbf16> to vector<64x128xbf16>
    %cst_113 = arith.constant dense<0.000000e+00> : vector<16x128xf32>
    %278 = tpu.matmul %275, %277, %cst_113 {dimension_numbers = #tpu.dot_dimension_numbers<[1], [0], [0], [1], [0, 0, 1, 1], [], []>} : vector<16x64xbf16>, vector<64x128xbf16>, vector<16x128xf32> -> vector<16x128xf32>
    %c1_114 = arith.constant 1 : index
    %c0_115 = arith.constant 0 : index
    %c0_116 = arith.constant 0 : index
    %279 = vector.load %arg12[%c1_114, %c0_115, %c0_116] : memref<2x1x128xf32, #tpu.memory_space<vmem>>, vector<1x1x128xf32>
    %280 = vector.shape_cast %279 : vector<1x1x128xf32> to vector<1x128xf32>
    %281 = vector.broadcast %280 : vector<1x128xf32> to vector<16x128xf32>
    %282 = arith.addf %278, %281 : vector<16x128xf32>
    %cst_117 = arith.constant 5.000000e-01 : f32
    %283 = vector.broadcast %cst_117 : f32 to vector<16x128xf32>
    %284 = arith.mulf %283, %282 : vector<16x128xf32>
    %cst_118 = arith.constant 4.471500e-02 : f32
    %285 = vector.broadcast %cst_118 : f32 to vector<16x128xf32>
    %286 = arith.mulf %285, %282 : vector<16x128xf32>
    %287 = arith.mulf %286, %282 : vector<16x128xf32>
    %288 = arith.mulf %287, %282 : vector<16x128xf32>
    %289 = arith.addf %282, %288 : vector<16x128xf32>
    %cst_119 = arith.constant 0.797884583 : f32
    %290 = vector.broadcast %cst_119 : f32 to vector<16x128xf32>
    %291 = arith.mulf %290, %289 : vector<16x128xf32>
    %292 = math.tanh %291 : vector<16x128xf32>
    %cst_120 = arith.constant 1.000000e+00 : f32
    %293 = vector.broadcast %cst_120 : f32 to vector<16x128xf32>
    %294 = arith.addf %293, %292 : vector<16x128xf32>
    %295 = arith.mulf %284, %294 : vector<16x128xf32>
    %296 = arith.truncf %295 : vector<16x128xf32> to vector<16x128xbf16>
    %c1_121 = arith.constant 1 : index
    %c0_122 = arith.constant 0 : index
    %c0_123 = arith.constant 0 : index
    %297 = vector.load %arg13[%c1_121, %c0_122, %c0_123] : memref<2x128x64xbf16, #tpu.memory_space<vmem>>, vector<1x128x64xbf16>
    %298 = vector.shape_cast %297 : vector<1x128x64xbf16> to vector<128x64xbf16>
    %cst_124 = arith.constant dense<0.000000e+00> : vector<16x64xf32>
    %299 = tpu.matmul %296, %298, %cst_124 {dimension_numbers = #tpu.dot_dimension_numbers<[1], [0], [0], [1], [0, 0, 1, 1], [], []>} : vector<16x128xbf16>, vector<128x64xbf16>, vector<16x64xf32> -> vector<16x64xf32>
    %c1_125 = arith.constant 1 : index
    %c0_126 = arith.constant 0 : index
    %c0_127 = arith.constant 0 : index
    %300 = vector.load %arg14[%c1_125, %c0_126, %c0_127] : memref<2x1x64xf32, #tpu.memory_space<vmem>>, vector<1x1x64xf32>
    %301 = vector.shape_cast %300 : vector<1x1x64xf32> to vector<1x64xf32>
    %302 = vector.broadcast %301 : vector<1x64xf32> to vector<16x64xf32>
    %303 = arith.addf %299, %302 : vector<16x64xf32>
    %304 = arith.addf %303, %274 : vector<16x64xf32>
    %c1_128 = arith.constant 1 : index
    %c0_129 = arith.constant 0 : index
    %c0_130 = arith.constant 0 : index
    %305 = vector.load %arg15[%c1_128, %c0_129, %c0_130] : memref<2x1x64xf32, #tpu.memory_space<vmem>>, vector<1x1x64xf32>
    %306 = vector.shape_cast %305 : vector<1x1x64xf32> to vector<1x64xf32>
    %c1_131 = arith.constant 1 : index
    %c0_132 = arith.constant 0 : index
    %c0_133 = arith.constant 0 : index
    %307 = vector.load %arg16[%c1_131, %c0_132, %c0_133] : memref<2x1x64xf32, #tpu.memory_space<vmem>>, vector<1x1x64xf32>
    %308 = vector.shape_cast %307 : vector<1x1x64xf32> to vector<1x64xf32>
    %cst_134 = arith.constant dense<0.000000e+00> : vector<16xf32>
    %309 = vector.multi_reduction <add>, %304, %cst_134 [1] : vector<16x64xf32> to vector<16xf32>
    %310 = vector.shape_cast %309 : vector<16xf32> to vector<16x1xf32>
    %cst_135 = arith.constant 6.400000e+01 : f32
    %311 = vector.broadcast %cst_135 : f32 to vector<16x1xf32>
    %312 = arith.divf %310, %311 : vector<16x1xf32>
    %313 = vector.broadcast %312 : vector<16x1xf32> to vector<16x64xf32>
    %314 = arith.subf %304, %313 : vector<16x64xf32>
    %315 = vector.broadcast %312 : vector<16x1xf32> to vector<16x64xf32>
    %316 = arith.subf %304, %315 : vector<16x64xf32>
    %317 = arith.mulf %314, %316 : vector<16x64xf32>
    %cst_136 = arith.constant dense<0.000000e+00> : vector<16xf32>
    %318 = vector.multi_reduction <add>, %317, %cst_136 [1] : vector<16x64xf32> to vector<16xf32>
    %319 = vector.shape_cast %318 : vector<16xf32> to vector<16x1xf32>
    %cst_137 = arith.constant 6.400000e+01 : f32
    %320 = vector.broadcast %cst_137 : f32 to vector<16x1xf32>
    %321 = arith.divf %319, %320 : vector<16x1xf32>
    %cst_138 = arith.constant 9.99999996E-13 : f32
    %322 = vector.broadcast %cst_138 : f32 to vector<16x1xf32>
    %323 = arith.addf %321, %322 : vector<16x1xf32>
    %324 = math.rsqrt %323 : vector<16x1xf32>
    %325 = vector.broadcast %312 : vector<16x1xf32> to vector<16x64xf32>
    %326 = arith.subf %304, %325 : vector<16x64xf32>
    %327 = vector.broadcast %324 : vector<16x1xf32> to vector<16x64xf32>
    %328 = arith.mulf %326, %327 : vector<16x64xf32>
    %329 = vector.broadcast %306 : vector<1x64xf32> to vector<16x64xf32>
    %330 = arith.mulf %328, %329 : vector<16x64xf32>
    %331 = vector.broadcast %308 : vector<1x64xf32> to vector<16x64xf32>
    %332 = arith.addf %330, %331 : vector<16x64xf32>
    %333 = vector.shape_cast %332 : vector<16x64xf32> to vector<2x8x64xf32>
    %334 = vector.extract_strided_slice %333 {offsets = [0, 0, 0], sizes = [2, 1, 64], strides = [1, 1, 1]} : vector<2x8x64xf32> to vector<2x1x64xf32>
    %335 = vector.shape_cast %334 : vector<2x1x64xf32> to vector<2x64xf32>
    %336 = arith.truncf %335 : vector<2x64xf32> to vector<2x64xbf16>
    %c0_139 = arith.constant 0 : index
    %c0_140 = arith.constant 0 : index
    %337 = vector.load %arg17[%c0_139, %c0_140] : memref<64x64xbf16, #tpu.memory_space<vmem>>, vector<64x64xbf16>
    %cst_141 = arith.constant dense<0.000000e+00> : vector<2x64xf32>
    %338 = tpu.matmul %336, %337, %cst_141 {dimension_numbers = #tpu.dot_dimension_numbers<[1], [0], [0], [1], [0, 0, 1, 1], [], []>} : vector<2x64xbf16>, vector<64x64xbf16>, vector<2x64xf32> -> vector<2x64xf32>
    %c0_142 = arith.constant 0 : index
    %c0_143 = arith.constant 0 : index
    %339 = vector.load %arg18[%c0_142, %c0_143] : memref<1x64xf32, #tpu.memory_space<vmem>>, vector<1x64xf32>
    %340 = vector.broadcast %339 : vector<1x64xf32> to vector<2x64xf32>
    %341 = arith.addf %338, %340 : vector<2x64xf32>
    %cst_144 = arith.constant 0.000000e+00 : f32
    %342 = vector.broadcast %cst_144 : f32 to vector<2x64xf32>
    %343 = arith.maximumf %341, %342 : vector<2x64xf32>
    %344 = arith.truncf %343 : vector<2x64xf32> to vector<2x64xbf16>
    %c0_145 = arith.constant 0 : index
    %c0_146 = arith.constant 0 : index
    %345 = vector.load %arg19[%c0_145, %c0_146] : memref<64x128xbf16, #tpu.memory_space<vmem>>, vector<64x128xbf16>
    %cst_147 = arith.constant dense<0.000000e+00> : vector<2x128xf32>
    %346 = tpu.matmul %344, %345, %cst_147 {dimension_numbers = #tpu.dot_dimension_numbers<[1], [0], [0], [1], [0, 0, 1, 1], [], []>} : vector<2x64xbf16>, vector<64x128xbf16>, vector<2x128xf32> -> vector<2x128xf32>
    %c0_148 = arith.constant 0 : index
    %c0_149 = arith.constant 0 : index
    %347 = vector.load %arg20[%c0_148, %c0_149] : memref<1x128xf32, #tpu.memory_space<vmem>>, vector<1x128xf32>
    %348 = vector.broadcast %347 : vector<1x128xf32> to vector<2x128xf32>
    %349 = arith.addf %346, %348 : vector<2x128xf32>
    %c0_150 = arith.constant 0 : index
    %c0_151 = arith.constant 0 : index
    %c0_152 = arith.constant 0 : index
    %350 = vector.load %arg21[%c0_150, %c0_151, %c0_152] : memref<1x2x128xf32, #tpu.memory_space<vmem>>, vector<1x2x128xf32>
    %351 = vector.shape_cast %350 : vector<1x2x128xf32> to vector<2x128xf32>
    %352 = vector.shape_cast %349 : vector<2x128xf32> to vector<1x2x128xf32>
    tpu.vector_store %arg21[%c0_150, %c0_151, %c0_152], %352 {strides = array<i32>} : memref<1x2x128xf32, #tpu.memory_space<vmem>>, vector<1x2x128xf32>,
    return
  }
  func.func @transform_0(%arg0: i32) -> (i32, i32) {
    %c0_i32 = arith.constant 0 : i32
    %c0_i32_0 = arith.constant 0 : i32
    return %arg0, %c0_i32 : i32, i32
  }
  func.func @transform_1(%arg0: i32) -> (i32, i32, i32) {
    %c0_i32 = arith.constant 0 : i32
    %c0_i32_0 = arith.constant 0 : i32
    %c0_i32_1 = arith.constant 0 : i32
    return %arg0, %c0_i32, %c0_i32_0 : i32, i32, i32
  }
  func.func @transform_2(%arg0: i32) -> (i32, i32) {
    %c0_i32 = arith.constant 0 : i32
    %c0_i32_0 = arith.constant 0 : i32
    %c0_i32_1 = arith.constant 0 : i32
    return %c0_i32, %c0_i32_0 : i32, i32
  }
  func.func @transform_3(%arg0: i32) -> (i32, i32) {
    %c0_i32 = arith.constant 0 : i32
    %c0_i32_0 = arith.constant 0 : i32
    %c0_i32_1 = arith.constant 0 : i32
    return %c0_i32, %c0_i32_0 : i32, i32
  }
  func.func @transform_4(%arg0: i32) -> (i32, i32, i32) {
    %c0_i32 = arith.constant 0 : i32
    %c0_i32_0 = arith.constant 0 : i32
    %c0_i32_1 = arith.constant 0 : i32
    %c0_i32_2 = arith.constant 0 : i32
    return %c0_i32, %c0_i32_0, %c0_i32_1 : i32, i32, i32
  }
  func.func @transform_5(%arg0: i32) -> (i32, i32, i32) {
    %c0_i32 = arith.constant 0 : i32
    %c0_i32_0 = arith.constant 0 : i32
    %c0_i32_1 = arith.constant 0 : i32
    %c0_i32_2 = arith.constant 0 : i32
    return %c0_i32, %c0_i32_0, %c0_i32_1 : i32, i32, i32
  }
  func.func @transform_6(%arg0: i32) -> (i32, i32, i32) {
    %c0_i32 = arith.constant 0 : i32
    %c0_i32_0 = arith.constant 0 : i32
    %c0_i32_1 = arith.constant 0 : i32
    %c0_i32_2 = arith.constant 0 : i32
    return %c0_i32, %c0_i32_0, %c0_i32_1 : i32, i32, i32
  }
  func.func @transform_7(%arg0: i32) -> (i32, i32, i32) {
    %c0_i32 = arith.constant 0 : i32
    %c0_i32_0 = arith.constant 0 : i32
    %c0_i32_1 = arith.constant 0 : i32
    %c0_i32_2 = arith.constant 0 : i32
    return %c0_i32, %c0_i32_0, %c0_i32_1 : i32, i32, i32
  }
  func.func @transform_8(%arg0: i32) -> (i32, i32, i32) {
    %c0_i32 = arith.constant 0 : i32
    %c0_i32_0 = arith.constant 0 : i32
    %c0_i32_1 = arith.constant 0 : i32
    %c0_i32_2 = arith.constant 0 : i32
    return %c0_i32, %c0_i32_0, %c0_i32_1 : i32, i32, i32
  }
  func.func @transform_9(%arg0: i32) -> (i32, i32, i32) {
    %c0_i32 = arith.constant 0 : i32
    %c0_i32_0 = arith.constant 0 : i32
    %c0_i32_1 = arith.constant 0 : i32
    %c0_i32_2 = arith.constant 0 : i32
    return %c0_i32, %c0_i32_0, %c0_i32_1 : i32, i32, i32
  }
  func.func @transform_10(%arg0: i32) -> (i32, i32, i32) {
    %c0_i32 = arith.constant 0 : i32
    %c0_i32_0 = arith.constant 0 : i32
    %c0_i32_1 = arith.constant 0 : i32
    %c0_i32_2 = arith.constant 0 : i32
    return %c0_i32, %c0_i32_0, %c0_i32_1 : i32, i32, i32
  }
  func.func @transform_11(%arg0: i32) -> (i32, i32, i32) {
    %c0_i32 = arith.constant 0 : i32
    %c0_i32_0 = arith.constant 0 : i32
    %c0_i32_1 = arith.constant 0 : i32
    %c0_i32_2 = arith.constant 0 : i32
    return %c0_i32, %c0_i32_0, %c0_i32_1 : i32, i32, i32
  }
  func.func @transform_12(%arg0: i32) -> (i32, i32, i32) {
    %c0_i32 = arith.constant 0 : i32
    %c0_i32_0 = arith.constant 0 : i32
    %c0_i32_1 = arith.constant 0 : i32
    %c0_i32_2 = arith.constant 0 : i32
    return %c0_i32, %c0_i32_0, %c0_i32_1 : i32, i32, i32
  }
  func.func @transform_13(%arg0: i32) -> (i32, i32, i32) {
    %c0_i32 = arith.constant 0 : i32
    %c0_i32_0 = arith.constant 0 : i32
    %c0_i32_1 = arith.constant 0 : i32
    %c0_i32_2 = arith.constant 0 : i32
    return %c0_i32, %c0_i32_0, %c0_i32_1 : i32, i32, i32
  }
  func.func @transform_14(%arg0: i32) -> (i32, i32, i32) {
    %c0_i32 = arith.constant 0 : i32
    %c0_i32_0 = arith.constant 0 : i32
    %c0_i32_1 = arith.constant 0 : i32
    %c0_i32_2 = arith.constant 0 : i32
    return %c0_i32, %c0_i32_0, %c0_i32_1 : i32, i32, i32
  }
  func.func @transform_15(%arg0: i32) -> (i32, i32, i32) {
    %c0_i32 = arith.constant 0 : i32
    %c0_i32_0 = arith.constant 0 : i32
    %c0_i32_1 = arith.constant 0 : i32
    %c0_i32_2 = arith.constant 0 : i32
    return %c0_i32, %c0_i32_0, %c0_i32_1 : i32, i32, i32
  }
  func.func @transform_16(%arg0: i32) -> (i32, i32) {
    %c0_i32 = arith.constant 0 : i32
    %c0_i32_0 = arith.constant 0 : i32
    %c0_i32_1 = arith.constant 0 : i32
    return %c0_i32, %c0_i32_0 : i32, i32
  }
  func.func @transform_17(%arg0: i32) -> (i32, i32) {
    %c0_i32 = arith.constant 0 : i32
    %c0_i32_0 = arith.constant 0 : i32
    %c0_i32_1 = arith.constant 0 : i32
    return %c0_i32, %c0_i32_0 : i32, i32
  }
  func.func @transform_18(%arg0: i32) -> (i32, i32) {
    %c0_i32 = arith.constant 0 : i32
    %c0_i32_0 = arith.constant 0 : i32
    %c0_i32_1 = arith.constant 0 : i32
    return %c0_i32, %c0_i32_0 : i32, i32
  }
  func.func @transform_19(%arg0: i32) -> (i32, i32) {
    %c0_i32 = arith.constant 0 : i32
    %c0_i32_0 = arith.constant 0 : i32
    %c0_i32_1 = arith.constant 0 : i32
    return %c0_i32, %c0_i32_0 : i32, i32
  }
  func.func @transform_20(%arg0: i32) -> (i32, i32, i32) {
    %c0_i32 = arith.constant 0 : i32
    %c0_i32_0 = arith.constant 0 : i32
    %c0_i32_1 = arith.constant 0 : i32
    return %arg0, %c0_i32, %c0_i32_0 : i32, i32, i32
  }
}

</mosaic_0001>

<llo_original>
// kernel: distilbert_forward.1
$region0: #{distilbert_forward.1}
  #allocation0 [shape = 'u32[]', space=smem, size = 0x4, offset = 0x4, fixed_abs, tag = 'smem constant byte address 0x4 - core index']
  #allocation1 [shape = 'u32[72,128]{1,0:T(1,128)}', space=vmem, size = 0x9000, scoped, tag = 'internal scratch']
  %s0 = inlined_call_operand.vmem [shape: bf16[16,64], index: 0, kind: input, shape index: {}]
  %s1 = inlined_call_operand.vmem [shape: f32[2,1,8], index: 1, kind: input, shape index: {}]
  %s2 = inlined_call_operand.vmem [shape: f32[1,64], index: 2, kind: input, shape index: {}]
  %s3 = inlined_call_operand.vmem [shape: f32[1,64], index: 3, kind: input, shape index: {}]
  %s4 = inlined_call_operand.vmem [shape: bf16[2,64,192], index: 4, kind: input, shape index: {}]
  %s5 = inlined_call_operand.vmem [shape: f32[2,1,192], index: 5, kind: input, shape index: {}]
  %s6 = inlined_call_operand.vmem [shape: bf16[2,64,64], index: 6, kind: input, shape index: {}]
  %s7 = inlined_call_operand.vmem [shape: f32[2,1,64], index: 7, kind: input, shape index: {}]
  %s8 = inlined_call_operand.vmem [shape: f32[2,1,64], index: 8, kind: input, shape index: {}]
  %s9 = inlined_call_operand.vmem [shape: f32[2,1,64], index: 9, kind: input, shape index: {}]
  %s10 = inlined_call_operand.vmem [shape: bf16[2,64,128], index: 10, kind: input, shape index: {}]
  %s11 = inlined_call_operand.vmem [shape: f32[2,1,128], index: 11, kind: input, shape index: {}]
  %s12 = inlined_call_operand.vmem [shape: bf16[2,128,64], index: 12, kind: input, shape index: {}]
  %s13 = inlined_call_operand.vmem [shape: f32[2,1,64], index: 13, kind: input, shape index: {}]
  %s14 = inlined_call_operand.vmem [shape: f32[2,1,64], index: 14, kind: input, shape index: {}]
  %s15 = inlined_call_operand.vmem [shape: f32[2,1,64], index: 15, kind: input, shape index: {}]
  %s16 = inlined_call_operand.vmem [shape: bf16[64,64], index: 16, kind: input, shape index: {}]
  %s17 = inlined_call_operand.vmem [shape: f32[1,64], index: 17, kind: input, shape index: {}]
  %s18 = inlined_call_operand.vmem [shape: bf16[64,128], index: 18, kind: input, shape index: {}]
  %s19 = inlined_call_operand.vmem [shape: f32[1,128], index: 19, kind: input, shape index: {}]
  %s20 = inlined_call_operand.hbm [shape: f32[1,2,128], index: 20, kind: output, shape index: {}]
  %s21 = sld [smem:[#allocation0]]
  $region90: #{distilbert_forward.1} parent=0
    _
  %s23 = ssub.s32 1, %s21
  %s24 = scalar_select 0, %s23, %s21
  $region1: #{distilbert_forward.1} parent=0
    #allocation2 [shape = 'u8[1024]{0}', space=vmem, size = 0x400, scoped, tag = 'output window, operand 0, single buffered']
    #allocation3 [shape = 's32[1]{0}', space=sflag, size = 0x4, scoped, tag = 'scoped memory for distilbert_forward.1']
    %25 = vsyncpa [#allocation3], 0
    // Predicated region
    $region2: #{distilbert_forward.1} parent=1 // pred_check
      _
    $region3: #{distilbert_forward.1} parent=1 // pred_check_branch
      %27 = sbr.rel (0) target = $region5
    $region4: #{distilbert_forward.1} parent=1 // pred_region
      _
    $region5: #{distilbert_forward.1} parent=1 // pred_fallthru
      _
    // Predicated region
    $region6: #{distilbert_forward.1} parent=1 // pred_check
      _
    $region7: #{distilbert_forward.1} parent=1 // pred_check_branch
      %29 = sbr.rel (0) target = $region9
    $region8: #{distilbert_forward.1} parent=1 // pred_region
      _
    $region9: #{distilbert_forward.1} parent=1 // pred_fallthru
      _
    // Predicated region
    $region10: #{distilbert_forward.1} parent=1 // pred_check
      _
    $region11: #{distilbert_forward.1} parent=1 // pred_check_branch
      %31 = sbr.rel (0) target = $region13
    $region12: #{distilbert_forward.1} parent=1 // pred_region
      _
    $region13: #{distilbert_forward.1} parent=1 // pred_fallthru
      _
    // Predicated region
    $region14: #{distilbert_forward.1} parent=1 // pred_check
      _
    $region15: #{distilbert_forward.1} parent=1 // pred_check_branch
      %33 = sbr.rel (0) target = $region17
    $region16: #{distilbert_forward.1} parent=1 // pred_region
      _
    $region17: #{distilbert_forward.1} parent=1 // pred_fallthru
      _
    // Predicated region
    $region18: #{distilbert_forward.1} parent=1 // pred_check
      _
    $region19: #{distilbert_forward.1} parent=1 // pred_check_branch
      %35 = sbr.rel (0) target = $region21
    $region20: #{distilbert_forward.1} parent=1 // pred_region
      _
    $region21: #{distilbert_forward.1} parent=1 // pred_fallthru
      _
    // Predicated region
    $region22: #{distilbert_forward.1} parent=1 // pred_check
      _
    $region23: #{distilbert_forward.1} parent=1 // pred_check_branch
      %37 = sbr.rel (0) target = $region25
    $region24: #{distilbert_forward.1} parent=1 // pred_region
      _
    $region25: #{distilbert_forward.1} parent=1 // pred_fallthru
      _
    // Predicated region
    $region26: #{distilbert_forward.1} parent=1 // pred_check
      _
    $region27: #{distilbert_forward.1} parent=1 // pred_check_branch
      %39 = sbr.rel (0) target = $region29
    $region28: #{distilbert_forward.1} parent=1 // pred_region
      _
    $region29: #{distilbert_forward.1} parent=1 // pred_fallthru
      _
    // Predicated region
    $region30: #{distilbert_forward.1} parent=1 // pred_check
      _
    $region31: #{distilbert_forward.1} parent=1 // pred_check_branch
      %41 = sbr.rel (0) target = $region33
    $region32: #{distilbert_forward.1} parent=1 // pred_region
      _
    $region33: #{distilbert_forward.1} parent=1 // pred_fallthru
      _
    // Predicated region
    $region34: #{distilbert_forward.1} parent=1 // pred_check
      _
    $region35: #{distilbert_forward.1} parent=1 // pred_check_branch
      %43 = sbr.rel (0) target = $region37
    $region36: #{distilbert_forward.1} parent=1 // pred_region
      _
    $region37: #{distilbert_forward.1} parent=1 // pred_fallthru
      _
    // Predicated region
    $region38: #{distilbert_forward.1} parent=1 // pred_check
      _
    $region39: #{distilbert_forward.1} parent=1 // pred_check_branch
      %45 = sbr.rel (0) target = $region41
    $region40: #{distilbert_forward.1} parent=1 // pred_region
      _
    $region41: #{distilbert_forward.1} parent=1 // pred_fallthru
      _
    // Predicated region
    $region42: #{distilbert_forward.1} parent=1 // pred_check
      _
    $region43: #{distilbert_forward.1} parent=1 // pred_check_branch
      %47 = sbr.rel (0) target = $region45
    $region44: #{distilbert_forward.1} parent=1 // pred_region
      _
    $region45: #{distilbert_forward.1} parent=1 // pred_fallthru
      _
    // Predicated region
    $region46: #{distilbert_forward.1} parent=1 // pred_check
      _
    $region47: #{distilbert_forward.1} parent=1 // pred_check_branch
      %49 = sbr.rel (0) target = $region49
    $region48: #{distilbert_forward.1} parent=1 // pred_region
      _
    $region49: #{distilbert_forward.1} parent=1 // pred_fallthru
      _
    // Predicated region
    $region50: #{distilbert_forward.1} parent=1 // pred_check
      _
    $region51: #{distilbert_forward.1} parent=1 // pred_check_branch
      %51 = sbr.rel (0) target = $region53
    $region52: #{distilbert_forward.1} parent=1 // pred_region
      _
    $region53: #{distilbert_forward.1} parent=1 // pred_fallthru
      _
    // Predicated region
    $region54: #{distilbert_forward.1} parent=1 // pred_check
      _
    $region55: #{distilbert_forward.1} parent=1 // pred_check_branch
      %53 = sbr.rel (0) target = $region57
    $region56: #{distilbert_forward.1} parent=1 // pred_region
      _
    $region57: #{distilbert_forward.1} parent=1 // pred_fallthru
      _
    // Predicated region
    $region58: #{distilbert_forward.1} parent=1 // pred_check
      _
    $region59: #{distilbert_forward.1} parent=1 // pred_check_branch
      %55 = sbr.rel (0) target = $region61
    $region60: #{distilbert_forward.1} parent=1 // pred_region
      _
    $region61: #{distilbert_forward.1} parent=1 // pred_fallthru
      _
    // Predicated region
    $region62: #{distilbert_forward.1} parent=1 // pred_check
      _
    $region63: #{distilbert_forward.1} parent=1 // pred_check_branch
      %57 = sbr.rel (0) target = $region65
    $region64: #{distilbert_forward.1} parent=1 // pred_region
      _
    $region65: #{distilbert_forward.1} parent=1 // pred_fallthru
      _
    // Predicated region
    $region66: #{distilbert_forward.1} parent=1 // pred_check
      _
    $region67: #{distilbert_forward.1} parent=1 // pred_check_branch
      %59 = sbr.rel (0) target = $region69
    $region68: #{distilbert_forward.1} parent=1 // pred_region
      _
    $region69: #{distilbert_forward.1} parent=1 // pred_fallthru
      _
    // Predicated region
    $region70: #{distilbert_forward.1} parent=1 // pred_check
      _
    $region71: #{distilbert_forward.1} parent=1 // pred_check_branch
      %61 = sbr.rel (0) target = $region73
    $region72: #{distilbert_forward.1} parent=1 // pred_region
      _
    $region73: #{distilbert_forward.1} parent=1 // pred_fallthru
      _
    // Predicated region
    $region74: #{distilbert_forward.1} parent=1 // pred_check
      _
    $region75: #{distilbert_forward.1} parent=1 // pred_check_branch
      %63 = sbr.rel (0) target = $region77
    $region76: #{distilbert_forward.1} parent=1 // pred_region
      _
    $region77: #{distilbert_forward.1} parent=1 // pred_fallthru
      _
    // Predicated region
    $region78: #{distilbert_forward.1} parent=1 // pred_check
      _
    $region79: #{distilbert_forward.1} parent=1 // pred_check_branch
      %65 = sbr.rel (0) target = $region81
    $region80: #{distilbert_forward.1} parent=1 // pred_region
      _
    $region81: #{distilbert_forward.1} parent=1 // pred_fallthru
      _
    %v67 = vld [vmem:[%s0] sm:$0xf]
    %v68 = vld [vmem:[%s0 + $0x4] sm:$0xf]
    %v69 = vunpack.c.l.bf16 %v67
    %v70 = vunpack.c.l.bf16 %v68
    %v71 = vld [vmem:[%s1] sm:$0x1]
    %v72 = vld [vmem:[%s1 + $0x1] sm:$0x1]
    %v73 = vld [vmem:[%s2] sm:$0x1]
    %v74 = vld [vmem:[%s3] sm:$0x1]
    %vm75 = vcmask 523264
    %v76 = vsel %vm75, %v69, 0.0
    %77 = vadd.xlane.f32.xlu0 %v76
    %v78 = vpop.xlane.xlu0 %77
    %v79 = vsel %vm75, %v70, 0.0
    %80 = vadd.xlane.f32.xlu0 %v79
    %v81 = vpop.xlane.xlu0 %80
    %v82 = vrcp.pop 64.0
    %v83 = vmul.f32 64.0, %v82
    %v84 = vsub.f32 1.0, %v83
    %v85 = vmul.f32 %v82, %v84
    %v86 = vadd.f32 %v82, %v85
    %vm87 = vweird.f32 %v82
    %v88 = vsel %vm87, %v82, %v86
    %v89 = vmul.f32 %v78, %v88
    %v90 = vmul.f32 %v81, %v88
    %v91 = vsub.f32 %v69, %v89
    %v92 = vsub.f32 %v70, %v90
    %v93 = vmul.f32 %v91, %v91
    %v94 = vmul.f32 %v92, %v92
    %v95 = vsel %vm75, %v93, 0.0
    %96 = vadd.xlane.f32.xlu0 %v95
    %v97 = vpop.xlane.xlu0 %96
    %v98 = vsel %vm75, %v94, 0.0
    %99 = vadd.xlane.f32.xlu0 %v98
    %v100 = vpop.xlane.xlu0 %99
    %v101 = vmul.f32 %v97, %v88
    %v102 = vmul.f32 %v100, %v88
    %v103 = vadd.f32 %v101, 1e-12
    %v104 = vadd.f32 %v102, 1e-12
    %v105 = vrsqrt.pop %v103
    %v106 = vmul.f32 %v105, %v103
    %v107 = vmul.f32 %v106, %v105
    %v108 = vmul.f32 0.5, %v107
    %v109 = vsub.f32 1.5, %v108
    %v110 = vmul.f32 %v105, %v109
    %vm111 = vweird.f32 %v103
    %vm112 = vweird.f32 %v105
    %vm113 = vmor %vm111, %vm112
    %v114 = vsel %vm113, %v105, %v110
    %v115 = vrsqrt.pop %v104
    %v116 = vmul.f32 %v115, %v104
    %v117 = vmul.f32 %v116, %v115
    %v118 = vmul.f32 0.5, %v117
    %v119 = vsub.f32 1.5, %v118
    %v120 = vmul.f32 %v115, %v119
    %vm121 = vweird.f32 %v104
    %vm122 = vweird.f32 %v115
    %vm123 = vmor %vm121, %vm122
    %v124 = vsel %vm123, %v115, %v120
    %v125 = vmul.f32 %v91, %v114
    %v126 = vmul.f32 %v92, %v124
    %v128 = vperm.slane %v73, 0
    %v130 = vmul.f32 %v125, %v128
    %v131 = vmul.f32 %v126, %v128
    %v133 = vperm.slane %v74, 0
    %v135 = vadd.f32 %v130, %v133
    %v136 = vadd.f32 %v131, %v133
    %v137 = vpack.c.bf16 %v136, %v135
    %v138 = vld [vmem:[%s4] sm:$0xff]
    %v139 = vld [vmem:[%s4 + $0x8] sm:$0xff]
    %v140 = vld [vmem:[%s4 + $0x10] sm:$0xff]
    %v141 = vld [vmem:[%s4 + $0x18] sm:$0xff]
    %v142 = vld [vmem:[%s4 + $0x20] sm:$0xff]
    %v143 = vld [vmem:[%s4 + $0x28] sm:$0xff]
    %v144 = vld [vmem:[%s4 + $0x30] sm:$0xff]
    %v145 = vld [vmem:[%s4 + $0x38] sm:$0xff]
    %v146 = vld [vmem:[%s5] sm:$0x3]
    %v148 = vperm.slane %v146, 0
    %v149 = vperm.slane %v146, 1
    %v160 = vunpack.c.l.b16 %v138
    %v161 = vunpack.c.h.b16 %v138
    %v162 = vunpack.c.l.b16 %v139
    %v163 = vunpack.c.h.b16 %v139
    %v164 = vunpack.c.l.b16 %v140
    %v165 = vunpack.c.h.b16 %v140
    %v166 = vunpack.c.l.b16 %v141
    %v167 = vunpack.c.h.b16 %v141
    %v168 = vunpack.c.l.b16 %v142
    %v169 = vunpack.c.h.b16 %v142
    %v170 = vunpack.c.l.b16 %v143
    %v171 = vunpack.c.h.b16 %v143
    %v172 = vunpack.c.l.b16 %v144
    %v173 = vunpack.c.h.b16 %v144
    %v174 = vunpack.c.l.b16 %v145
    %v175 = vunpack.c.h.b16 %v145
    %v176 = vpack.c.b16 %v162, %v160
    %v177 = vpack.c.b16 %v163, %v161
    %v178 = vpack.c.b16 %v166, %v164
    %v179 = vpack.c.b16 %v167, %v165
    %v180 = vpack.c.b16 %v170, %v168
    %v181 = vpack.c.b16 %v171, %v169
    %v182 = vpack.c.b16 %v174, %v172
    %v183 = vpack.c.b16 %v175, %v173
    %v193 = vsel %vm75, %v137, 0
    %195 = vmatpush.bf16.msra.mxu0 0
    %196 = vmatpush.bf16.msra.mxu0 0
    %197 = vmatpush.bf16.msra.mxu0 0
    %198 = vmatpush.bf16.msra.mxu0 0
    %199 = vmatpush.bf16.msra.mxu0 %v182
    %200 = vmatpush.bf16.msra.mxu0 %v180
    %201 = vmatpush.bf16.msra.mxu0 %v178
    %202 = vmatpush.bf16.msra.mxu0 %v176
    %203 = vmatmul.bf16.gmra.mxu0 %v193
    %v204 = vpop.f32.mrf.mxu0
    %v205 = vadd.f32 %v148, %v204
    %v206 = vpop.f32.mrf.mxu0
    %v207 = vadd.f32 %v148, %v206
    %208 = vdwg.mxu0
    %209 = vmatpush.bf16.msra.mxu0 0
    %210 = vmatpush.bf16.msra.mxu0 0
    %211 = vmatpush.bf16.msra.mxu0 0
    %212 = vmatpush.bf16.msra.mxu0 0
    %213 = vmatpush.bf16.msra.mxu0 %v183
    %214 = vmatpush.bf16.msra.mxu0 %v181
    %215 = vmatpush.bf16.msra.mxu0 %v179
    %216 = vmatpush.bf16.msra.mxu0 %v177
    %217 = vmatmul.bf16.gmra.mxu0 %v193
    %v218 = vpop.f32.mrf.mxu0
    %v219 = vadd.f32 %v149, %v218
    %v220 = vpop.f32.mrf.mxu0
    %v221 = vadd.f32 %v149, %v220
    %222 = vdwg.mxu0
    %v223 = vpack.c.bf16 %v205, %v205
    %v224 = vpack.c.bf16 %v207, %v207
    %v226 = vunpack.c.l.b16 %v223
    %v227 = vpack.c.b16 %v226, %v226
    %228 = vrot.lane.b32.xlu0 %v227, 64
    %v229 = vpop.permute.xlu0 %228
    %vm230 = vcmask 261120
    %v232 = vsel %vm230, %v223, 0
    %v235 = vsel %vm230, %v229, 0
    %237 = vmatpush.bf16.xpose.msra.mxu0 0
    %238 = vmatpush.bf16.xpose.msra.mxu0 0
    %239 = vmatpush.bf16.xpose.msra.mxu0 0
    %240 = vmatpush.bf16.xpose.msra.mxu0 0
    %241 = vmatpush.bf16.xpose.msra.mxu0 0
    %242 = vmatpush.bf16.xpose.msra.mxu0 0
    %243 = vmatpush.bf16.xpose.msra.mxu0 0
    %244 = vmatpush.bf16.xpose.msra.mxu0 %v235
    %245 = vmatmul.bf16.gmra.mxu0 %v232
    %v246 = vpop.f32.mrf.mxu0
    %v247 = vadd.f32 0.0, %v246
    %v248 = vpop.f32.mrf.mxu0
    %249 = vdwg.mxu0
    %v251 = vunpack.c.l.b16 %v224
    %v252 = vpack.c.b16 %v251, %v251
    %253 = vrot.lane.b32.xlu0 %v252, 64
    %v254 = vpop.permute.xlu0 %253
    %v256 = vsel %vm230, %v224, 0
    %v259 = vsel %vm230, %v254, 0
    %261 = vmatpush.bf16.xpose.msra.mxu0 0
    %262 = vmatpush.bf16.xpose.msra.mxu0 0
    %263 = vmatpush.bf16.xpose.msra.mxu0 0
    %264 = vmatpush.bf16.xpose.msra.mxu0 0
    %265 = vmatpush.bf16.xpose.msra.mxu0 0
    %266 = vmatpush.bf16.xpose.msra.mxu0 0
    %267 = vmatpush.bf16.xpose.msra.mxu0 0
    %268 = vmatpush.bf16.xpose.msra.mxu0 %v259
    %269 = vmatmul.bf16.gmra.mxu0 %v256
    %v270 = vpop.f32.mrf.mxu0
    %v271 = vadd.f32 0.0, %v270
    %v272 = vpop.f32.mrf.mxu0
    %273 = vdwg.mxu0
    %v274 = vmul.f32 %v247, 0.17677669
    %v275 = vmul.f32 %v271, 0.17677669
    %v278 = vperm.slane %v71, 0
    %v279 = vperm.slane %v72, 0
    %v282 = vadd.f32 %v274, %v278
    %v283 = vadd.f32 %v275, %v279
    %vm284 = vcmask 64512
    %v285 = vsel %vm284, %v282, -inf
    %286 = vmax.xlane.f32.xlu0 %v285
    %v287 = vpop.xlane.xlu0 %286
    %v288 = vsel %vm284, %v283, -inf
    %289 = vmax.xlane.f32.xlu0 %v288
    %v290 = vpop.xlane.xlu0 %289
    %v291 = vsub.f32 %v282, %v287
    %v292 = vsub.f32 %v283, %v290
    %v293 = vmul.f32 %v291, 1.442695
    %v294 = vpow.pop %v293
    %v295 = vmul.f32 %v292, 1.442695
    %v296 = vpow.pop %v295
    %v297 = vsel %vm284, %v294, 0.0
    %298 = vadd.xlane.f32.xlu0 %v297
    %v299 = vpop.xlane.xlu0 %298
    %v300 = vsel %vm284, %v296, 0.0
    %301 = vadd.xlane.f32.xlu0 %v300
    %v302 = vpop.xlane.xlu0 %301
    %v303 = vrcp.pop %v299
    %v304 = vrcp.pop %v302
    %v305 = vmul.f32 %v294, %v303
    %v306 = vmul.f32 %v296, %v304
    %v307 = vpack.c.bf16 %v305, %v305
    %v308 = vpack.c.bf16 %v306, %v306
    %v309 = vpack.c.bf16 %v219, %v219
    %v310 = vpack.c.bf16 %v221, %v221
    %v312 = vsel %vm284, %v307, 0
    %vm314 = vcmask 1043456
    %v316 = vsel %vm314, %v309, 0
    %318 = vmatpush.bf16.msra.mxu0 0
    %319 = vmatpush.bf16.msra.mxu0 0
    %320 = vmatpush.bf16.msra.mxu0 0
    %321 = vmatpush.bf16.msra.mxu0 0
    %322 = vmatpush.bf16.msra.mxu0 0
    %323 = vmatpush.bf16.msra.mxu0 0
    %324 = vmatpush.bf16.msra.mxu0 0
    %325 = vmatpush.bf16.msra.mxu0 %v316
    %326 = vmatmul.bf16.gmra.mxu0 %v312
    %v327 = vpop.f32.mrf.mxu0
    %v328 = vadd.f32 0.0, %v327
    %v329 = vpop.f32.mrf.mxu0
    %330 = vdwg.mxu0
    %v332 = vsel %vm284, %v308, 0
    %v335 = vsel %vm314, %v310, 0
    %337 = vmatpush.bf16.msra.mxu0 0
    %338 = vmatpush.bf16.msra.mxu0 0
    %339 = vmatpush.bf16.msra.mxu0 0
    %340 = vmatpush.bf16.msra.mxu0 0
    %341 = vmatpush.bf16.msra.mxu0 0
    %342 = vmatpush.bf16.msra.mxu0 0
    %343 = vmatpush.bf16.msra.mxu0 0
    %344 = vmatpush.bf16.msra.mxu0 %v335
    %345 = vmatmul.bf16.gmra.mxu0 %v332
    %v346 = vpop.f32.mrf.mxu0
    %v347 = vadd.f32 0.0, %v346
    %v348 = vpop.f32.mrf.mxu0
    %349 = vdwg.mxu0
    %350 = vrot.lane.b32.xlu0 %v227, 96
    %v351 = vpop.permute.xlu0 %350
    %352 = vrot.lane.b32.xlu0 %v227, 32
    %v353 = vpop.permute.xlu0 %352
    %v355 = vsel %vm230, %v351, 0
    %v358 = vsel %vm230, %v353, 0
    %360 = vmatpush.bf16.xpose.msra.mxu0 0
    %361 = vmatpush.bf16.xpose.msra.mxu0 0
    %362 = vmatpush.bf16.xpose.msra.mxu0 0
    %363 = vmatpush.bf16.xpose.msra.mxu0 0
    %364 = vmatpush.bf16.xpose.msra.mxu0 0
    %365 = vmatpush.bf16.xpose.msra.mxu0 0
    %366 = vmatpush.bf16.xpose.msra.mxu0 0
    %367 = vmatpush.bf16.xpose.msra.mxu0 %v358
    %368 = vmatmul.bf16.gmra.mxu0 %v355
    %v369 = vpop.f32.mrf.mxu0
    %v370 = vadd.f32 0.0, %v369
    %v371 = vpop.f32.mrf.mxu0
    %372 = vdwg.mxu0
    %373 = vrot.lane.b32.xlu0 %v252, 96
    %v374 = vpop.permute.xlu0 %373
    %375 = vrot.lane.b32.xlu0 %v252, 32
    %v376 = vpop.permute.xlu0 %375
    %v378 = vsel %vm230, %v374, 0
    %v381 = vsel %vm230, %v376, 0
    %383 = vmatpush.bf16.xpose.msra.mxu0 0
    %384 = vmatpush.bf16.xpose.msra.mxu0 0
    %385 = vmatpush.bf16.xpose.msra.mxu0 0
    %386 = vmatpush.bf16.xpose.msra.mxu0 0
    %387 = vmatpush.bf16.xpose.msra.mxu0 0
    %388 = vmatpush.bf16.xpose.msra.mxu0 0
    %389 = vmatpush.bf16.xpose.msra.mxu0 0
    %390 = vmatpush.bf16.xpose.msra.mxu0 %v381
    %391 = vmatmul.bf16.gmra.mxu0 %v378
    %v392 = vpop.f32.mrf.mxu0
    %v393 = vadd.f32 0.0, %v392
    %v394 = vpop.f32.mrf.mxu0
    %395 = vdwg.mxu0
    %v396 = vmul.f32 %v370, 0.17677669
    %v397 = vmul.f32 %v393, 0.17677669
    %v398 = vadd.f32 %v396, %v278
    %v399 = vadd.f32 %v397, %v279
    %v400 = vsel %vm284, %v398, -inf
    %401 = vmax.xlane.f32.xlu0 %v400
    %v402 = vpop.xlane.xlu0 %401
    %v403 = vsel %vm284, %v399, -inf
    %404 = vmax.xlane.f32.xlu0 %v403
    %v405 = vpop.xlane.xlu0 %404
    %v406 = vsub.f32 %v398, %v402
    %v407 = vsub.f32 %v399, %v405
    %v408 = vmul.f32 %v406, 1.442695
    %v409 = vpow.pop %v408
    %v410 = vmul.f32 %v407, 1.442695
    %v411 = vpow.pop %v410
    %v412 = vsel %vm284, %v409, 0.0
    %413 = vadd.xlane.f32.xlu0 %v412
    %v414 = vpop.xlane.xlu0 %413
    %v415 = vsel %vm284, %v411, 0.0
    %416 = vadd.xlane.f32.xlu0 %v415
    %v417 = vpop.xlane.xlu0 %416
    %v418 = vrcp.pop %v414
    %v419 = vrcp.pop %v417
    %v420 = vmul.f32 %v409, %v418
    %v421 = vmul.f32 %v411, %v419
    %v422 = vpack.c.bf16 %v420, %v420
    %v423 = vpack.c.bf16 %v421, %v421
    %v425 = vunpack.c.l.b16 %v309
    %v426 = vpack.c.b16 %v425, %v425
    %427 = vrot.lane.b32.xlu0 %v426, 96
    %v428 = vpop.permute.xlu0 %427
    %v430 = vsel %vm284, %v422, 0
    %v433 = vsel %vm314, %v428, 0
    %435 = vmatpush.bf16.msra.mxu0 0
    %436 = vmatpush.bf16.msra.mxu0 0
    %437 = vmatpush.bf16.msra.mxu0 0
    %438 = vmatpush.bf16.msra.mxu0 0
    %439 = vmatpush.bf16.msra.mxu0 0
    %440 = vmatpush.bf16.msra.mxu0 0
    %441 = vmatpush.bf16.msra.mxu0 0
    %442 = vmatpush.bf16.msra.mxu0 %v433
    %443 = vmatmul.bf16.gmra.mxu0 %v430
    %v444 = vpop.f32.mrf.mxu0
    %v445 = vadd.f32 0.0, %v444
    %v446 = vpop.f32.mrf.mxu0
    %447 = vdwg.mxu0
    %v449 = vunpack.c.l.b16 %v310
    %v450 = vpack.c.b16 %v449, %v449
    %451 = vrot.lane.b32.xlu0 %v450, 96
    %v452 = vpop.permute.xlu0 %451
    %v454 = vsel %vm284, %v423, 0
    %v457 = vsel %vm314, %v452, 0
    %459 = vmatpush.bf16.msra.mxu0 0
    %460 = vmatpush.bf16.msra.mxu0 0
    %461 = vmatpush.bf16.msra.mxu0 0
    %462 = vmatpush.bf16.msra.mxu0 0
    %463 = vmatpush.bf16.msra.mxu0 0
    %464 = vmatpush.bf16.msra.mxu0 0
    %465 = vmatpush.bf16.msra.mxu0 0
    %466 = vmatpush.bf16.msra.mxu0 %v457
    %467 = vmatmul.bf16.gmra.mxu0 %v454
    %v468 = vpop.f32.mrf.mxu0
    %v469 = vadd.f32 0.0, %v468
    %v470 = vpop.f32.mrf.mxu0
    %471 = vdwg.mxu0
    %474 = vrot.lane.b32.xlu0 %v445, 32
    %v475 = vpop.permute.xlu0 %474
    %476 = vrot.lane.b32.xlu0 %v469, 32
    %v477 = vpop.permute.xlu0 %476
    %v480 = vsel %vm230, %v328, %v475
    %v481 = vsel %vm230, %v347, %v477
    %v482 = vpack.c.bf16 %v481, %v480
    %v483 = vld [vmem:[%s6] sm:$0xf]
    %v484 = vld [vmem:[%s6 + $0x4] sm:$0xf]
    %v485 = vld [vmem:[%s6 + $0x8] sm:$0xf]
    %v486 = vld [vmem:[%s6 + $0xc] sm:$0xf]
    %v487 = vld [vmem:[%s6 + $0x10] sm:$0xf]
    %v488 = vld [vmem:[%s6 + $0x14] sm:$0xf]
    %v489 = vld [vmem:[%s6 + $0x18] sm:$0xf]
    %v490 = vld [vmem:[%s6 + $0x1c] sm:$0xf]
    %v491 = vld [vmem:[%s7] sm:$0x1]
    %v493 = vperm.slane %v491, 0
    %v503 = vunpack.c.l.b16 %v483
    %v504 = vunpack.c.l.b16 %v484
    %v505 = vunpack.c.l.b16 %v485
    %v506 = vunpack.c.l.b16 %v486
    %v507 = vunpack.c.l.b16 %v487
    %v508 = vunpack.c.l.b16 %v488
    %v509 = vunpack.c.l.b16 %v489
    %v510 = vunpack.c.l.b16 %v490
    %v511 = vpack.c.b16 %v504, %v503
    %v512 = vpack.c.b16 %v506, %v505
    %v513 = vpack.c.b16 %v508, %v507
    %v514 = vpack.c.b16 %v510, %v509
    %v520 = vsel %vm75, %v482, 0
    %522 = vmatpush.bf16.msra.mxu0 0
    %523 = vmatpush.bf16.msra.mxu0 0
    %524 = vmatpush.bf16.msra.mxu0 0
    %525 = vmatpush.bf16.msra.mxu0 0
    %526 = vmatpush.bf16.msra.mxu0 %v514
    %527 = vmatpush.bf16.msra.mxu0 %v513
    %528 = vmatpush.bf16.msra.mxu0 %v512
    %529 = vmatpush.bf16.msra.mxu0 %v511
    %530 = vmatmul.bf16.gmra.mxu0 %v520
    %v531 = vpop.f32.mrf.mxu0
    %v532 = vadd.f32 %v493, %v531
    %v533 = vpop.f32.mrf.mxu0
    %v534 = vadd.f32 %v493, %v533
    %535 = vdwg.mxu0
    %v536 = vadd.f32 %v532, %v135
    %v537 = vadd.f32 %v534, %v136
    %v538 = vld [vmem:[%s8] sm:$0x1]
    %v539 = vld [vmem:[%s9] sm:$0x1]
    %v540 = vsel %vm75, %v536, 0.0
    %541 = vadd.xlane.f32.xlu0 %v540
    %v542 = vpop.xlane.xlu0 %541
    %v543 = vsel %vm75, %v537, 0.0
    %544 = vadd.xlane.f32.xlu0 %v543
    %v545 = vpop.xlane.xlu0 %544
    %v546 = vmul.f32 %v542, %v88
    %v547 = vmul.f32 %v545, %v88
    %v548 = vsub.f32 %v536, %v546
    %v549 = vsub.f32 %v537, %v547
    %v550 = vmul.f32 %v548, %v548
    %v551 = vmul.f32 %v549, %v549
    %v552 = vsel %vm75, %v550, 0.0
    %553 = vadd.xlane.f32.xlu0 %v552
    %v554 = vpop.xlane.xlu0 %553
    %v555 = vsel %vm75, %v551, 0.0
    %556 = vadd.xlane.f32.xlu0 %v555
    %v557 = vpop.xlane.xlu0 %556
    %v558 = vmul.f32 %v554, %v88
    %v559 = vmul.f32 %v557, %v88
    %v560 = vadd.f32 %v558, 1e-12
    %v561 = vadd.f32 %v559, 1e-12
    %v562 = vrsqrt.pop %v560
    %v563 = vmul.f32 %v562, %v560
    %v564 = vmul.f32 %v563, %v562
    %v565 = vmul.f32 0.5, %v564
    %v566 = vsub.f32 1.5, %v565
    %v567 = vmul.f32 %v562, %v566
    %vm568 = vweird.f32 %v560
    %vm569 = vweird.f32 %v562
    %vm570 = vmor %vm568, %vm569
    %v571 = vsel %vm570, %v562, %v567
    %v572 = vrsqrt.pop %v561
    %v573 = vmul.f32 %v572, %v561
    %v574 = vmul.f32 %v573, %v572
    %v575 = vmul.f32 0.5, %v574
    %v576 = vsub.f32 1.5, %v575
    %v577 = vmul.f32 %v572, %v576
    %vm578 = vweird.f32 %v561
    %vm579 = vweird.f32 %v572
    %vm580 = vmor %vm578, %vm579
    %v581 = vsel %vm580, %v572, %v577
    %v582 = vmul.f32 %v548, %v571
    %v583 = vmul.f32 %v549, %v581
    %v585 = vperm.slane %v538, 0
    %v587 = vmul.f32 %v582, %v585
    %v588 = vmul.f32 %v583, %v585
    %v590 = vperm.slane %v539, 0
    %v592 = vadd.f32 %v587, %v590
    %v593 = vadd.f32 %v588, %v590
    %v594 = vpack.c.bf16 %v593, %v592
    %v595 = vld [vmem:[%s10] sm:$0xf]
    %v596 = vld [vmem:[%s10 + $0x4] sm:$0xf]
    %v597 = vld [vmem:[%s10 + $0x8] sm:$0xf]
    %v598 = vld [vmem:[%s10 + $0xc] sm:$0xf]
    %v599 = vld [vmem:[%s10 + $0x10] sm:$0xf]
    %v600 = vld [vmem:[%s10 + $0x14] sm:$0xf]
    %v601 = vld [vmem:[%s10 + $0x18] sm:$0xf]
    %v602 = vld [vmem:[%s10 + $0x1c] sm:$0xf]
    %v603 = vld [vmem:[%s11] sm:$0x1]
    %v605 = vperm.slane %v603, 0
    %v615 = vunpack.c.l.b16 %v595
    %v616 = vunpack.c.l.b16 %v596
    %v617 = vunpack.c.l.b16 %v597
    %v618 = vunpack.c.l.b16 %v598
    %v619 = vunpack.c.l.b16 %v599
    %v620 = vunpack.c.l.b16 %v600
    %v621 = vunpack.c.l.b16 %v601
    %v622 = vunpack.c.l.b16 %v602
    %v623 = vpack.c.b16 %v616, %v615
    %v624 = vpack.c.b16 %v618, %v617
    %v625 = vpack.c.b16 %v620, %v619
    %v626 = vpack.c.b16 %v622, %v621
    %v632 = vsel %vm75, %v594, 0
    %634 = vmatpush.bf16.msra.mxu0 0
    %635 = vmatpush.bf16.msra.mxu0 0
    %636 = vmatpush.bf16.msra.mxu0 0
    %637 = vmatpush.bf16.msra.mxu0 0
    %638 = vmatpush.bf16.msra.mxu0 %v626
    %639 = vmatpush.bf16.msra.mxu0 %v625
    %640 = vmatpush.bf16.msra.mxu0 %v624
    %641 = vmatpush.bf16.msra.mxu0 %v623
    %642 = vmatmul.bf16.gmra.mxu0 %v632
    %v643 = vpop.f32.mrf.mxu0
    %v644 = vadd.f32 %v605, %v643
    %v645 = vpop.f32.mrf.mxu0
    %v646 = vadd.f32 %v605, %v645
    %647 = vdwg.mxu0
    %v648 = vmul.f32 %v644, 0.5
    %v649 = vmul.f32 %v646, 0.5
    %v650 = vmul.f32 %v644, 0.044715
    %v651 = vmul.f32 %v646, 0.044715
    %v652 = vmul.f32 %v650, %v644
    %v653 = vmul.f32 %v651, %v646
    %v654 = vmul.f32 %v652, %v644
    %v655 = vmul.f32 %v653, %v646
    %v656 = vadd.f32 %v644, %v654
    %v657 = vadd.f32 %v646, %v655
    %v658 = vmul.f32 %v656, 0.7978846
    %v659 = vmul.f32 %v657, 0.7978846
    %v660 = vtanh.pop %v658
    %v661 = vtanh.pop %v659
    %v662 = vadd.f32 %v660, 1.0
    %v663 = vadd.f32 %v661, 1.0
    %v664 = vmul.f32 %v648, %v662
    %v665 = vmul.f32 %v649, %v663
    %v666 = vpack.c.bf16 %v665, %v664
    %v667 = vld [vmem:[%s12] sm:$0xf]
    %v668 = vld [vmem:[%s12 + $0x4] sm:$0xf]
    %v669 = vld [vmem:[%s12 + $0x8] sm:$0xf]
    %v670 = vld [vmem:[%s12 + $0xc] sm:$0xf]
    %v671 = vld [vmem:[%s12 + $0x10] sm:$0xf]
    %v672 = vld [vmem:[%s12 + $0x14] sm:$0xf]
    %v673 = vld [vmem:[%s12 + $0x18] sm:$0xf]
    %v674 = vld [vmem:[%s12 + $0x1c] sm:$0xf]
    %v675 = vld [vmem:[%s12 + $0x20] sm:$0xf]
    %v676 = vld [vmem:[%s12 + $0x24] sm:$0xf]
    %v677 = vld [vmem:[%s12 + $0x28] sm:$0xf]
    %v678 = vld [vmem:[%s12 + $0x2c] sm:$0xf]
    %v679 = vld [vmem:[%s12 + $0x30] sm:$0xf]
    %v680 = vld [vmem:[%s12 + $0x34] sm:$0xf]
    %v681 = vld [vmem:[%s12 + $0x38] sm:$0xf]
    %v682 = vld [vmem:[%s12 + $0x3c] sm:$0xf]
    %v683 = vld [vmem:[%s13] sm:$0x1]
    %v685 = vperm.slane %v683, 0
    %v703 = vunpack.c.l.b16 %v667
    %v704 = vunpack.c.l.b16 %v668
    %v705 = vunpack.c.l.b16 %v669
    %v706 = vunpack.c.l.b16 %v670
    %v707 = vunpack.c.l.b16 %v671
    %v708 = vunpack.c.l.b16 %v672
    %v709 = vunpack.c.l.b16 %v673
    %v710 = vunpack.c.l.b16 %v674
    %v711 = vunpack.c.l.b16 %v675
    %v712 = vunpack.c.l.b16 %v676
    %v713 = vunpack.c.l.b16 %v677
    %v714 = vunpack.c.l.b16 %v678
    %v715 = vunpack.c.l.b16 %v679
    %v716 = vunpack.c.l.b16 %v680
    %v717 = vunpack.c.l.b16 %v681
    %v718 = vunpack.c.l.b16 %v682
    %v719 = vpack.c.b16 %v704, %v703
    %v720 = vpack.c.b16 %v706, %v705
    %v721 = vpack.c.b16 %v708, %v707
    %v722 = vpack.c.b16 %v710, %v709
    %v723 = vpack.c.b16 %v712, %v711
    %v724 = vpack.c.b16 %v714, %v713
    %v725 = vpack.c.b16 %v716, %v715
    %v726 = vpack.c.b16 %v718, %v717
    %735 = vmatpush.bf16.msra.mxu0 %v726
    %736 = vmatpush.bf16.msra.mxu0 %v725
    %737 = vmatpush.bf16.msra.mxu0 %v724
    %738 = vmatpush.bf16.msra.mxu0 %v723
    %739 = vmatpush.bf16.msra.mxu0 %v722
    %740 = vmatpush.bf16.msra.mxu0 %v721
    %741 = vmatpush.bf16.msra.mxu0 %v720
    %742 = vmatpush.bf16.msra.mxu0 %v719
    %743 = vmatmul.bf16.gmra.mxu0 %v666
    %v744 = vpop.f32.mrf.mxu0
    %v745 = vadd.f32 %v685, %v744
    %v746 = vpop.f32.mrf.mxu0
    %v747 = vadd.f32 %v685, %v746
    %748 = vdwg.mxu0
    %v749 = vadd.f32 %v745, %v592
    %v750 = vadd.f32 %v747, %v593
    %v751 = vld [vmem:[%s14] sm:$0x1]
    %v752 = vld [vmem:[%s15] sm:$0x1]
    %v753 = vsel %vm75, %v749, 0.0
    %754 = vadd.xlane.f32.xlu0 %v753
    %v755 = vpop.xlane.xlu0 %754
    %v756 = vsel %vm75, %v750, 0.0
    %757 = vadd.xlane.f32.xlu0 %v756
    %v758 = vpop.xlane.xlu0 %757
    %v759 = vmul.f32 %v755, %v88
    %v760 = vmul.f32 %v758, %v88
    %v761 = vsub.f32 %v749, %v759
    %v762 = vsub.f32 %v750, %v760
    %v763 = vmul.f32 %v761, %v761
    %v764 = vmul.f32 %v762, %v762
    %v765 = vsel %vm75, %v763, 0.0
    %766 = vadd.xlane.f32.xlu0 %v765
    %v767 = vpop.xlane.xlu0 %766
    %v768 = vsel %vm75, %v764, 0.0
    %769 = vadd.xlane.f32.xlu0 %v768
    %v770 = vpop.xlane.xlu0 %769
    %v771 = vmul.f32 %v767, %v88
    %v772 = vmul.f32 %v770, %v88
    %v773 = vadd.f32 %v771, 1e-12
    %v774 = vadd.f32 %v772, 1e-12
    %v775 = vrsqrt.pop %v773
    %v776 = vmul.f32 %v775, %v773
    %v777 = vmul.f32 %v776, %v775
    %v778 = vmul.f32 0.5, %v777
    %v779 = vsub.f32 1.5, %v778
    %v780 = vmul.f32 %v775, %v779
    %vm781 = vweird.f32 %v773
    %vm782 = vweird.f32 %v775
    %vm783 = vmor %vm781, %vm782
    %v784 = vsel %vm783, %v775, %v780
    %v785 = vrsqrt.pop %v774
    %v786 = vmul.f32 %v785, %v774
    %v787 = vmul.f32 %v786, %v785
    %v788 = vmul.f32 0.5, %v787
    %v789 = vsub.f32 1.5, %v788
    %v790 = vmul.f32 %v785, %v789
    %vm791 = vweird.f32 %v774
    %vm792 = vweird.f32 %v785
    %vm793 = vmor %vm791, %vm792
    %v794 = vsel %vm793, %v785, %v790
    %v795 = vmul.f32 %v761, %v784
    %v796 = vmul.f32 %v762, %v794
    %v798 = vperm.slane %v751, 0
    %v800 = vmul.f32 %v795, %v798
    %v801 = vmul.f32 %v796, %v798
    %v803 = vperm.slane %v752, 0
    %v805 = vadd.f32 %v800, %v803
    %v806 = vadd.f32 %v801, %v803
    %v807 = vpack.c.bf16 %v806, %v805
    %s808 = scalar_lea.vmem %s4, 64
    %v809 = vld [vmem:[%s808] sm:$0xff]
    %v810 = vld [vmem:[%s808 + $0x8] sm:$0xff]
    %v811 = vld [vmem:[%s808 + $0x10] sm:$0xff]
    %v812 = vld [vmem:[%s808 + $0x18] sm:$0xff]
    %v813 = vld [vmem:[%s808 + $0x20] sm:$0xff]
    %v814 = vld [vmem:[%s808 + $0x28] sm:$0xff]
    %v815 = vld [vmem:[%s808 + $0x30] sm:$0xff]
    %v816 = vld [vmem:[%s808 + $0x38] sm:$0xff]
    %s817 = scalar_lea.vmem %s5, 2
    %v818 = vld [vmem:[%s817] sm:$0x3]
    %v820 = vperm.slane %v818, 0
    %v821 = vperm.slane %v818, 1
    %v832 = vunpack.c.l.b16 %v809
    %v833 = vunpack.c.h.b16 %v809
    %v834 = vunpack.c.l.b16 %v810
    %v835 = vunpack.c.h.b16 %v810
    %v836 = vunpack.c.l.b16 %v811
    %v837 = vunpack.c.h.b16 %v811
    %v838 = vunpack.c.l.b16 %v812
    %v839 = vunpack.c.h.b16 %v812
    %v840 = vunpack.c.l.b16 %v813
    %v841 = vunpack.c.h.b16 %v813
    %v842 = vunpack.c.l.b16 %v814
    %v843 = vunpack.c.h.b16 %v814
    %v844 = vunpack.c.l.b16 %v815
    %v845 = vunpack.c.h.b16 %v815
    %v846 = vunpack.c.l.b16 %v816
    %v847 = vunpack.c.h.b16 %v816
    %v848 = vpack.c.b16 %v834, %v832
    %v849 = vpack.c.b16 %v835, %v833
    %v850 = vpack.c.b16 %v838, %v836
    %v851 = vpack.c.b16 %v839, %v837
    %v852 = vpack.c.b16 %v842, %v840
    %v853 = vpack.c.b16 %v843, %v841
    %v854 = vpack.c.b16 %v846, %v844
    %v855 = vpack.c.b16 %v847, %v845
    %v865 = vsel %vm75, %v807, 0
    %867 = vmatpush.bf16.msra.mxu0 0
    %868 = vmatpush.bf16.msra.mxu0 0
    %869 = vmatpush.bf16.msra.mxu0 0
    %870 = vmatpush.bf16.msra.mxu0 0
    %871 = vmatpush.bf16.msra.mxu0 %v854
    %872 = vmatpush.bf16.msra.mxu0 %v852
    %873 = vmatpush.bf16.msra.mxu0 %v850
    %874 = vmatpush.bf16.msra.mxu0 %v848
    %875 = vmatmul.bf16.gmra.mxu0 %v865
    %v876 = vpop.f32.mrf.mxu0
    %v877 = vadd.f32 %v820, %v876
    %v878 = vpop.f32.mrf.mxu0
    %v879 = vadd.f32 %v820, %v878
    %880 = vdwg.mxu0
    %881 = vmatpush.bf16.msra.mxu0 0
    %882 = vmatpush.bf16.msra.mxu0 0
    %883 = vmatpush.bf16.msra.mxu0 0
    %884 = vmatpush.bf16.msra.mxu0 0
    %885 = vmatpush.bf16.msra.mxu0 %v855
    %886 = vmatpush.bf16.msra.mxu0 %v853
    %887 = vmatpush.bf16.msra.mxu0 %v851
    %888 = vmatpush.bf16.msra.mxu0 %v849
    %889 = vmatmul.bf16.gmra.mxu0 %v865
    %v890 = vpop.f32.mrf.mxu0
    %v891 = vadd.f32 %v821, %v890
    %v892 = vpop.f32.mrf.mxu0
    %v893 = vadd.f32 %v821, %v892
    %894 = vdwg.mxu0
    %v895 = vpack.c.bf16 %v877, %v877
    %v896 = vpack.c.bf16 %v879, %v879
    %v898 = vunpack.c.l.b16 %v895
    %v899 = vpack.c.b16 %v898, %v898
    %900 = vrot.lane.b32.xlu0 %v899, 64
    %v901 = vpop.permute.xlu0 %900
    %v903 = vsel %vm230, %v895, 0
    %v906 = vsel %vm230, %v901, 0
    %908 = vmatpush.bf16.xpose.msra.mxu0 0
    %909 = vmatpush.bf16.xpose.msra.mxu0 0
    %910 = vmatpush.bf16.xpose.msra.mxu0 0
    %911 = vmatpush.bf16.xpose.msra.mxu0 0
    %912 = vmatpush.bf16.xpose.msra.mxu0 0
    %913 = vmatpush.bf16.xpose.msra.mxu0 0
    %914 = vmatpush.bf16.xpose.msra.mxu0 0
    %915 = vmatpush.bf16.xpose.msra.mxu0 %v906
    %916 = vmatmul.bf16.gmra.mxu0 %v903
    %v917 = vpop.f32.mrf.mxu0
    %v918 = vadd.f32 0.0, %v917
    %v919 = vpop.f32.mrf.mxu0
    %920 = vdwg.mxu0
    %v922 = vunpack.c.l.b16 %v896
    %v923 = vpack.c.b16 %v922, %v922
    %924 = vrot.lane.b32.xlu0 %v923, 64
    %v925 = vpop.permute.xlu0 %924
    %v927 = vsel %vm230, %v896, 0
    %v930 = vsel %vm230, %v925, 0
    %932 = vmatpush.bf16.xpose.msra.mxu0 0
    %933 = vmatpush.bf16.xpose.msra.mxu0 0
    %934 = vmatpush.bf16.xpose.msra.mxu0 0
    %935 = vmatpush.bf16.xpose.msra.mxu0 0
    %936 = vmatpush.bf16.xpose.msra.mxu0 0
    %937 = vmatpush.bf16.xpose.msra.mxu0 0
    %938 = vmatpush.bf16.xpose.msra.mxu0 0
    %939 = vmatpush.bf16.xpose.msra.mxu0 %v930
    %940 = vmatmul.bf16.gmra.mxu0 %v927
    %v941 = vpop.f32.mrf.mxu0
    %v942 = vadd.f32 0.0, %v941
    %v943 = vpop.f32.mrf.mxu0
    %944 = vdwg.mxu0
    %v945 = vmul.f32 %v918, 0.17677669
    %v946 = vmul.f32 %v942, 0.17677669
    %v947 = vadd.f32 %v945, %v278
    %v948 = vadd.f32 %v946, %v279
    %v949 = vsel %vm284, %v947, -inf
    %950 = vmax.xlane.f32.xlu0 %v949
    %v951 = vpop.xlane.xlu0 %950
    %v952 = vsel %vm284, %v948, -inf
    %953 = vmax.xlane.f32.xlu0 %v952
    %v954 = vpop.xlane.xlu0 %953
    %v955 = vsub.f32 %v947, %v951
    %v956 = vsub.f32 %v948, %v954
    %v957 = vmul.f32 %v955, 1.442695
    %v958 = vpow.pop %v957
    %v959 = vmul.f32 %v956, 1.442695
    %v960 = vpow.pop %v959
    %v961 = vsel %vm284, %v958, 0.0
    %962 = vadd.xlane.f32.xlu0 %v961
    %v963 = vpop.xlane.xlu0 %962
    %v964 = vsel %vm284, %v960, 0.0
    %965 = vadd.xlane.f32.xlu0 %v964
    %v966 = vpop.xlane.xlu0 %965
    %v967 = vrcp.pop %v963
    %v968 = vrcp.pop %v966
    %v969 = vmul.f32 %v958, %v967
    %v970 = vmul.f32 %v960, %v968
    %v971 = vpack.c.bf16 %v969, %v969
    %v972 = vpack.c.bf16 %v970, %v970
    %v973 = vpack.c.bf16 %v891, %v891
    %v974 = vpack.c.bf16 %v893, %v893
    %v976 = vsel %vm284, %v971, 0
    %v979 = vsel %vm314, %v973, 0
    %981 = vmatpush.bf16.msra.mxu0 0
    %982 = vmatpush.bf16.msra.mxu0 0
    %983 = vmatpush.bf16.msra.mxu0 0
    %984 = vmatpush.bf16.msra.mxu0 0
    %985 = vmatpush.bf16.msra.mxu0 0
    %986 = vmatpush.bf16.msra.mxu0 0
    %987 = vmatpush.bf16.msra.mxu0 0
    %988 = vmatpush.bf16.msra.mxu0 %v979
    %989 = vmatmul.bf16.gmra.mxu0 %v976
    %v990 = vpop.f32.mrf.mxu0
    %v991 = vadd.f32 0.0, %v990
    %v992 = vpop.f32.mrf.mxu0
    %993 = vdwg.mxu0
    %v995 = vsel %vm284, %v972, 0
    %v998 = vsel %vm314, %v974, 0
    %1000 = vmatpush.bf16.msra.mxu0 0
    %1001 = vmatpush.bf16.msra.mxu0 0
    %1002 = vmatpush.bf16.msra.mxu0 0
    %1003 = vmatpush.bf16.msra.mxu0 0
    %1004 = vmatpush.bf16.msra.mxu0 0
    %1005 = vmatpush.bf16.msra.mxu0 0
    %1006 = vmatpush.bf16.msra.mxu0 0
    %1007 = vmatpush.bf16.msra.mxu0 %v998
    %1008 = vmatmul.bf16.gmra.mxu0 %v995
    %v1009 = vpop.f32.mrf.mxu0
    %v1010 = vadd.f32 0.0, %v1009
    %v1011 = vpop.f32.mrf.mxu0
    %1012 = vdwg.mxu0
    %1013 = vrot.lane.b32.xlu0 %v899, 96
    %v1014 = vpop.permute.xlu0 %1013
    %1015 = vrot.lane.b32.xlu0 %v899, 32
    %v1016 = vpop.permute.xlu0 %1015
    %v1018 = vsel %vm230, %v1014, 0
    %v1021 = vsel %vm230, %v1016, 0
    %1023 = vmatpush.bf16.xpose.msra.mxu0 0
    %1024 = vmatpush.bf16.xpose.msra.mxu0 0
    %1025 = vmatpush.bf16.xpose.msra.mxu0 0
    %1026 = vmatpush.bf16.xpose.msra.mxu0 0
    %1027 = vmatpush.bf16.xpose.msra.mxu0 0
    %1028 = vmatpush.bf16.xpose.msra.mxu0 0
    %1029 = vmatpush.bf16.xpose.msra.mxu0 0
    %1030 = vmatpush.bf16.xpose.msra.mxu0 %v1021
    %1031 = vmatmul.bf16.gmra.mxu0 %v1018
    %v1032 = vpop.f32.mrf.mxu0
    %v1033 = vadd.f32 0.0, %v1032
    %v1034 = vpop.f32.mrf.mxu0
    %1035 = vdwg.mxu0
    %1036 = vrot.lane.b32.xlu0 %v923, 96
    %v1037 = vpop.permute.xlu0 %1036
    %1038 = vrot.lane.b32.xlu0 %v923, 32
    %v1039 = vpop.permute.xlu0 %1038
    %v1041 = vsel %vm230, %v1037, 0
    %v1044 = vsel %vm230, %v1039, 0
    %1046 = vmatpush.bf16.xpose.msra.mxu0 0
    %1047 = vmatpush.bf16.xpose.msra.mxu0 0
    %1048 = vmatpush.bf16.xpose.msra.mxu0 0
    %1049 = vmatpush.bf16.xpose.msra.mxu0 0
    %1050 = vmatpush.bf16.xpose.msra.mxu0 0
    %1051 = vmatpush.bf16.xpose.msra.mxu0 0
    %1052 = vmatpush.bf16.xpose.msra.mxu0 0
    %1053 = vmatpush.bf16.xpose.msra.mxu0 %v1044
    %1054 = vmatmul.bf16.gmra.mxu0 %v1041
    %v1055 = vpop.f32.mrf.mxu0
    %v1056 = vadd.f32 0.0, %v1055
    %v1057 = vpop.f32.mrf.mxu0
    %1058 = vdwg.mxu0
    %v1059 = vmul.f32 %v1033, 0.17677669
    %v1060 = vmul.f32 %v1056, 0.17677669
    %v1061 = vadd.f32 %v1059, %v278
    %v1062 = vadd.f32 %v1060, %v279
    %v1063 = vsel %vm284, %v1061, -inf
    %1064 = vmax.xlane.f32.xlu0 %v1063
    %v1065 = vpop.xlane.xlu0 %1064
    %v1066 = vsel %vm284, %v1062, -inf
    %1067 = vmax.xlane.f32.xlu0 %v1066
    %v1068 = vpop.xlane.xlu0 %1067
    %v1069 = vsub.f32 %v1061, %v1065
    %v1070 = vsub.f32 %v1062, %v1068
    %v1071 = vmul.f32 %v1069, 1.442695
    %v1072 = vpow.pop %v1071
    %v1073 = vmul.f32 %v1070, 1.442695
    %v1074 = vpow.pop %v1073
    %v1075 = vsel %vm284, %v1072, 0.0
    %1076 = vadd.xlane.f32.xlu0 %v1075
    %v1077 = vpop.xlane.xlu0 %1076
    %v1078 = vsel %vm284, %v1074, 0.0
    %1079 = vadd.xlane.f32.xlu0 %v1078
    %v1080 = vpop.xlane.xlu0 %1079
    %v1081 = vrcp.pop %v1077
    %v1082 = vrcp.pop %v1080
    %v1083 = vmul.f32 %v1072, %v1081
    %v1084 = vmul.f32 %v1074, %v1082
    %v1085 = vpack.c.bf16 %v1083, %v1083
    %v1086 = vpack.c.bf16 %v1084, %v1084
    %v1088 = vunpack.c.l.b16 %v973
    %v1089 = vpack.c.b16 %v1088, %v1088
    %1090 = vrot.lane.b32.xlu0 %v1089, 96
    %v1091 = vpop.permute.xlu0 %1090
    %v1093 = vsel %vm284, %v1085, 0
    %v1096 = vsel %vm314, %v1091, 0
    %1098 = vmatpush.bf16.msra.mxu0 0
    %1099 = vmatpush.bf16.msra.mxu0 0
    %1100 = vmatpush.bf16.msra.mxu0 0
    %1101 = vmatpush.bf16.msra.mxu0 0
    %1102 = vmatpush.bf16.msra.mxu0 0
    %1103 = vmatpush.bf16.msra.mxu0 0
    %1104 = vmatpush.bf16.msra.mxu0 0
    %1105 = vmatpush.bf16.msra.mxu0 %v1096
    %1106 = vmatmul.bf16.gmra.mxu0 %v1093
    %v1107 = vpop.f32.mrf.mxu0
    %v1108 = vadd.f32 0.0, %v1107
    %v1109 = vpop.f32.mrf.mxu0
    %1110 = vdwg.mxu0
    %v1112 = vunpack.c.l.b16 %v974
    %v1113 = vpack.c.b16 %v1112, %v1112
    %1114 = vrot.lane.b32.xlu0 %v1113, 96
    %v1115 = vpop.permute.xlu0 %1114
    %v1117 = vsel %vm284, %v1086, 0
    %v1120 = vsel %vm314, %v1115, 0
    %1122 = vmatpush.bf16.msra.mxu0 0
    %1123 = vmatpush.bf16.msra.mxu0 0
    %1124 = vmatpush.bf16.msra.mxu0 0
    %1125 = vmatpush.bf16.msra.mxu0 0
    %1126 = vmatpush.bf16.msra.mxu0 0
    %1127 = vmatpush.bf16.msra.mxu0 0
    %1128 = vmatpush.bf16.msra.mxu0 0
    %1129 = vmatpush.bf16.msra.mxu0 %v1120
    %1130 = vmatmul.bf16.gmra.mxu0 %v1117
    %v1131 = vpop.f32.mrf.mxu0
    %v1132 = vadd.f32 0.0, %v1131
    %v1133 = vpop.f32.mrf.mxu0
    %1134 = vdwg.mxu0
    %1137 = vrot.lane.b32.xlu0 %v1108, 32
    %v1138 = vpop.permute.xlu0 %1137
    %1139 = vrot.lane.b32.xlu0 %v1132, 32
    %v1140 = vpop.permute.xlu0 %1139
    %v1143 = vsel %vm230, %v991, %v1138
    %v1144 = vsel %vm230, %v1010, %v1140
    %v1145 = vpack.c.bf16 %v1144, %v1143
    %s1146 = scalar_lea.vmem %s6, 32
    %v1147 = vld [vmem:[%s1146] sm:$0xf]
    %v1148 = vld [vmem:[%s1146 + $0x4] sm:$0xf]
    %v1149 = vld [vmem:[%s1146 + $0x8] sm:$0xf]
    %v1150 = vld [vmem:[%s1146 + $0xc] sm:$0xf]
    %v1151 = vld [vmem:[%s1146 + $0x10] sm:$0xf]
    %v1152 = vld [vmem:[%s1146 + $0x14] sm:$0xf]
    %v1153 = vld [vmem:[%s1146 + $0x18] sm:$0xf]
    %v1154 = vld [vmem:[%s1146 + $0x1c] sm:$0xf]
    %s1155 = scalar_lea.vmem %s7, 1
    %v1156 = vld [vmem:[%s1155] sm:$0x1]
    %v1158 = vperm.slane %v1156, 0
    %v1168 = vunpack.c.l.b16 %v1147
    %v1169 = vunpack.c.l.b16 %v1148
    %v1170 = vunpack.c.l.b16 %v1149
    %v1171 = vunpack.c.l.b16 %v1150
    %v1172 = vunpack.c.l.b16 %v1151
    %v1173 = vunpack.c.l.b16 %v1152
    %v1174 = vunpack.c.l.b16 %v1153
    %v1175 = vunpack.c.l.b16 %v1154
    %v1176 = vpack.c.b16 %v1169, %v1168
    %v1177 = vpack.c.b16 %v1171, %v1170
    %v1178 = vpack.c.b16 %v1173, %v1172
    %v1179 = vpack.c.b16 %v1175, %v1174
    %v1185 = vsel %vm75, %v1145, 0
    %1187 = vmatpush.bf16.msra.mxu0 0
    %1188 = vmatpush.bf16.msra.mxu0 0
    %1189 = vmatpush.bf16.msra.mxu0 0
    %1190 = vmatpush.bf16.msra.mxu0 0
    %1191 = vmatpush.bf16.msra.mxu0 %v1179
    %1192 = vmatpush.bf16.msra.mxu0 %v1178
    %1193 = vmatpush.bf16.msra.mxu0 %v1177
    %1194 = vmatpush.bf16.msra.mxu0 %v1176
    %1195 = vmatmul.bf16.gmra.mxu0 %v1185
    %v1196 = vpop.f32.mrf.mxu0
    %v1197 = vadd.f32 %v1158, %v1196
    %v1198 = vpop.f32.mrf.mxu0
    %v1199 = vadd.f32 %v1158, %v1198
    %1200 = vdwg.mxu0
    %v1201 = vadd.f32 %v1197, %v805
    %v1202 = vadd.f32 %v1199, %v806
    %s1203 = scalar_lea.vmem %s8, 1
    %v1204 = vld [vmem:[%s1203] sm:$0x1]
    %s1205 = scalar_lea.vmem %s9, 1
    %v1206 = vld [vmem:[%s1205] sm:$0x1]
    %v1207 = vsel %vm75, %v1201, 0.0
    %1208 = vadd.xlane.f32.xlu0 %v1207
    %v1209 = vpop.xlane.xlu0 %1208
    %v1210 = vsel %vm75, %v1202, 0.0
    %1211 = vadd.xlane.f32.xlu0 %v1210
    %v1212 = vpop.xlane.xlu0 %1211
    %v1213 = vmul.f32 %v1209, %v88
    %v1214 = vmul.f32 %v1212, %v88
    %v1215 = vsub.f32 %v1201, %v1213
    %v1216 = vsub.f32 %v1202, %v1214
    %v1217 = vmul.f32 %v1215, %v1215
    %v1218 = vmul.f32 %v1216, %v1216
    %v1219 = vsel %vm75, %v1217, 0.0
    %1220 = vadd.xlane.f32.xlu0 %v1219
    %v1221 = vpop.xlane.xlu0 %1220
    %v1222 = vsel %vm75, %v1218, 0.0
    %1223 = vadd.xlane.f32.xlu0 %v1222
    %v1224 = vpop.xlane.xlu0 %1223
    %v1225 = vmul.f32 %v1221, %v88
    %v1226 = vmul.f32 %v1224, %v88
    %v1227 = vadd.f32 %v1225, 1e-12
    %v1228 = vadd.f32 %v1226, 1e-12
    %v1229 = vrsqrt.pop %v1227
    %v1230 = vmul.f32 %v1229, %v1227
    %v1231 = vmul.f32 %v1230, %v1229
    %v1232 = vmul.f32 0.5, %v1231
    %v1233 = vsub.f32 1.5, %v1232
    %v1234 = vmul.f32 %v1229, %v1233
    %vm1235 = vweird.f32 %v1227
    %vm1236 = vweird.f32 %v1229
    %vm1237 = vmor %vm1235, %vm1236
    %v1238 = vsel %vm1237, %v1229, %v1234
    %v1239 = vrsqrt.pop %v1228
    %v1240 = vmul.f32 %v1239, %v1228
    %v1241 = vmul.f32 %v1240, %v1239
    %v1242 = vmul.f32 0.5, %v1241
    %v1243 = vsub.f32 1.5, %v1242
    %v1244 = vmul.f32 %v1239, %v1243
    %vm1245 = vweird.f32 %v1228
    %vm1246 = vweird.f32 %v1239
    %vm1247 = vmor %vm1245, %vm1246
    %v1248 = vsel %vm1247, %v1239, %v1244
    %v1249 = vmul.f32 %v1215, %v1238
    %v1250 = vmul.f32 %v1216, %v1248
    %v1252 = vperm.slane %v1204, 0
    %v1254 = vmul.f32 %v1249, %v1252
    %v1255 = vmul.f32 %v1250, %v1252
    %v1257 = vperm.slane %v1206, 0
    %v1259 = vadd.f32 %v1254, %v1257
    %v1260 = vadd.f32 %v1255, %v1257
    %v1261 = vpack.c.bf16 %v1260, %v1259
    %s1262 = scalar_lea.vmem %s10, 32
    %v1263 = vld [vmem:[%s1262] sm:$0xf]
    %v1264 = vld [vmem:[%s1262 + $0x4] sm:$0xf]
    %v1265 = vld [vmem:[%s1262 + $0x8] sm:$0xf]
    %v1266 = vld [vmem:[%s1262 + $0xc] sm:$0xf]
    %v1267 = vld [vmem:[%s1262 + $0x10] sm:$0xf]
    %v1268 = vld [vmem:[%s1262 + $0x14] sm:$0xf]
    %v1269 = vld [vmem:[%s1262 + $0x18] sm:$0xf]
    %v1270 = vld [vmem:[%s1262 + $0x1c] sm:$0xf]
    %s1271 = scalar_lea.vmem %s11, 1
    %v1272 = vld [vmem:[%s1271] sm:$0x1]
    %v1274 = vperm.slane %v1272, 0
    %v1284 = vunpack.c.l.b16 %v1263
    %v1285 = vunpack.c.l.b16 %v1264
    %v1286 = vunpack.c.l.b16 %v1265
    %v1287 = vunpack.c.l.b16 %v1266
    %v1288 = vunpack.c.l.b16 %v1267
    %v1289 = vunpack.c.l.b16 %v1268
    %v1290 = vunpack.c.l.b16 %v1269
    %v1291 = vunpack.c.l.b16 %v1270
    %v1292 = vpack.c.b16 %v1285, %v1284
    %v1293 = vpack.c.b16 %v1287, %v1286
    %v1294 = vpack.c.b16 %v1289, %v1288
    %v1295 = vpack.c.b16 %v1291, %v1290
    %v1301 = vsel %vm75, %v1261, 0
    %1303 = vmatpush.bf16.msra.mxu0 0
    %1304 = vmatpush.bf16.msra.mxu0 0
    %1305 = vmatpush.bf16.msra.mxu0 0
    %1306 = vmatpush.bf16.msra.mxu0 0
    %1307 = vmatpush.bf16.msra.mxu0 %v1295
    %1308 = vmatpush.bf16.msra.mxu0 %v1294
    %1309 = vmatpush.bf16.msra.mxu0 %v1293
    %1310 = vmatpush.bf16.msra.mxu0 %v1292
    %1311 = vmatmul.bf16.gmra.mxu0 %v1301
    %v1312 = vpop.f32.mrf.mxu0
    %v1313 = vadd.f32 %v1274, %v1312
    %v1314 = vpop.f32.mrf.mxu0
    %v1315 = vadd.f32 %v1274, %v1314
    %1316 = vdwg.mxu0
    %v1317 = vmul.f32 %v1313, 0.5
    %v1318 = vmul.f32 %v1315, 0.5
    %v1319 = vmul.f32 %v1313, 0.044715
    %v1320 = vmul.f32 %v1315, 0.044715
    %v1321 = vmul.f32 %v1319, %v1313
    %v1322 = vmul.f32 %v1320, %v1315
    %v1323 = vmul.f32 %v1321, %v1313
    %v1324 = vmul.f32 %v1322, %v1315
    %v1325 = vadd.f32 %v1313, %v1323
    %v1326 = vadd.f32 %v1315, %v1324
    %v1327 = vmul.f32 %v1325, 0.7978846
    %v1328 = vmul.f32 %v1326, 0.7978846
    %v1329 = vtanh.pop %v1327
    %v1330 = vtanh.pop %v1328
    %v1331 = vadd.f32 %v1329, 1.0
    %v1332 = vadd.f32 %v1330, 1.0
    %v1333 = vmul.f32 %v1317, %v1331
    %v1334 = vmul.f32 %v1318, %v1332
    %v1335 = vpack.c.bf16 %v1334, %v1333
    %s1336 = scalar_lea.vmem %s12, 64
    %v1337 = vld [vmem:[%s1336] sm:$0xf]
    %v1338 = vld [vmem:[%s1336 + $0x4] sm:$0xf]
    %v1339 = vld [vmem:[%s1336 + $0x8] sm:$0xf]
    %v1340 = vld [vmem:[%s1336 + $0xc] sm:$0xf]
    %v1341 = vld [vmem:[%s1336 + $0x10] sm:$0xf]
    %v1342 = vld [vmem:[%s1336 + $0x14] sm:$0xf]
    %v1343 = vld [vmem:[%s1336 + $0x18] sm:$0xf]
    %v1344 = vld [vmem:[%s1336 + $0x1c] sm:$0xf]
    %v1345 = vld [vmem:[%s1336 + $0x20] sm:$0xf]
    %v1346 = vld [vmem:[%s1336 + $0x24] sm:$0xf]
    %v1347 = vld [vmem:[%s1336 + $0x28] sm:$0xf]
    %v1348 = vld [vmem:[%s1336 + $0x2c] sm:$0xf]
    %v1349 = vld [vmem:[%s1336 + $0x30] sm:$0xf]
    %v1350 = vld [vmem:[%s1336 + $0x34] sm:$0xf]
    %v1351 = vld [vmem:[%s1336 + $0x38] sm:$0xf]
    %v1352 = vld [vmem:[%s1336 + $0x3c] sm:$0xf]
    %s1353 = scalar_lea.vmem %s13, 1
    %v1354 = vld [vmem:[%s1353] sm:$0x1]
    %v1356 = vperm.slane %v1354, 0
    %v1374 = vunpack.c.l.b16 %v1337
    %v1375 = vunpack.c.l.b16 %v1338
    %v1376 = vunpack.c.l.b16 %v1339
    %v1377 = vunpack.c.l.b16 %v1340
    %v1378 = vunpack.c.l.b16 %v1341
    %v1379 = vunpack.c.l.b16 %v1342
    %v1380 = vunpack.c.l.b16 %v1343
    %v1381 = vunpack.c.l.b16 %v1344
    %v1382 = vunpack.c.l.b16 %v1345
    %v1383 = vunpack.c.l.b16 %v1346
    %v1384 = vunpack.c.l.b16 %v1347
    %v1385 = vunpack.c.l.b16 %v1348
    %v1386 = vunpack.c.l.b16 %v1349
    %v1387 = vunpack.c.l.b16 %v1350
    %v1388 = vunpack.c.l.b16 %v1351
    %v1389 = vunpack.c.l.b16 %v1352
    %v1390 = vpack.c.b16 %v1375, %v1374
    %v1391 = vpack.c.b16 %v1377, %v1376
    %v1392 = vpack.c.b16 %v1379, %v1378
    %v1393 = vpack.c.b16 %v1381, %v1380
    %v1394 = vpack.c.b16 %v1383, %v1382
    %v1395 = vpack.c.b16 %v1385, %v1384
    %v1396 = vpack.c.b16 %v1387, %v1386
    %v1397 = vpack.c.b16 %v1389, %v1388
    %1406 = vmatpush.bf16.msra.mxu0 %v1397
    %1407 = vmatpush.bf16.msra.mxu0 %v1396
    %1408 = vmatpush.bf16.msra.mxu0 %v1395
    %1409 = vmatpush.bf16.msra.mxu0 %v1394
    %1410 = vmatpush.bf16.msra.mxu0 %v1393
    %1411 = vmatpush.bf16.msra.mxu0 %v1392
    %1412 = vmatpush.bf16.msra.mxu0 %v1391
    %1413 = vmatpush.bf16.msra.mxu0 %v1390
    %1414 = vmatmul.bf16.gmra.mxu0 %v1335
    %v1415 = vpop.f32.mrf.mxu0
    %v1416 = vadd.f32 %v1356, %v1415
    %v1417 = vpop.f32.mrf.mxu0
    %v1418 = vadd.f32 %v1356, %v1417
    %1419 = vdwg.mxu0
    %v1420 = vadd.f32 %v1416, %v1259
    %v1421 = vadd.f32 %v1418, %v1260
    %s1422 = scalar_lea.vmem %s14, 1
    %v1423 = vld [vmem:[%s1422] sm:$0x1]
    %s1424 = scalar_lea.vmem %s15, 1
    %v1425 = vld [vmem:[%s1424] sm:$0x1]
    %v1426 = vsel %vm75, %v1420, 0.0
    %1427 = vadd.xlane.f32.xlu0 %v1426
    %v1428 = vpop.xlane.xlu0 %1427
    %v1429 = vsel %vm75, %v1421, 0.0
    %1430 = vadd.xlane.f32.xlu0 %v1429
    %v1431 = vpop.xlane.xlu0 %1430
    %v1432 = vmul.f32 %v1428, %v88
    %v1433 = vmul.f32 %v1431, %v88
    %v1434 = vsub.f32 %v1420, %v1432
    %v1435 = vsub.f32 %v1421, %v1433
    %v1436 = vmul.f32 %v1434, %v1434
    %v1437 = vmul.f32 %v1435, %v1435
    %v1438 = vsel %vm75, %v1436, 0.0
    %1439 = vadd.xlane.f32.xlu0 %v1438
    %v1440 = vpop.xlane.xlu0 %1439
    %v1441 = vsel %vm75, %v1437, 0.0
    %1442 = vadd.xlane.f32.xlu0 %v1441
    %v1443 = vpop.xlane.xlu0 %1442
    %v1444 = vmul.f32 %v1440, %v88
    %v1445 = vmul.f32 %v1443, %v88
    %v1446 = vadd.f32 %v1444, 1e-12
    %v1447 = vadd.f32 %v1445, 1e-12
    %v1448 = vrsqrt.pop %v1446
    %v1449 = vmul.f32 %v1448, %v1446
    %v1450 = vmul.f32 %v1449, %v1448
    %v1451 = vmul.f32 0.5, %v1450
    %v1452 = vsub.f32 1.5, %v1451
    %v1453 = vmul.f32 %v1448, %v1452
    %vm1454 = vweird.f32 %v1446
    %vm1455 = vweird.f32 %v1448
    %vm1456 = vmor %vm1454, %vm1455
    %v1457 = vsel %vm1456, %v1448, %v1453
    %v1458 = vrsqrt.pop %v1447
    %v1459 = vmul.f32 %v1458, %v1447
    %v1460 = vmul.f32 %v1459, %v1458
    %v1461 = vmul.f32 0.5, %v1460
    %v1462 = vsub.f32 1.5, %v1461
    %v1463 = vmul.f32 %v1458, %v1462
    %vm1464 = vweird.f32 %v1447
    %vm1465 = vweird.f32 %v1458
    %vm1466 = vmor %vm1464, %vm1465
    %v1467 = vsel %vm1466, %v1458, %v1463
    %v1468 = vmul.f32 %v1434, %v1457
    %v1469 = vmul.f32 %v1435, %v1467
    %v1471 = vperm.slane %v1423, 0
    %v1473 = vmul.f32 %v1468, %v1471
    %v1474 = vmul.f32 %v1469, %v1471
    %v1476 = vperm.slane %v1425, 0
    %v1478 = vadd.f32 %v1473, %v1476
    %v1479 = vadd.f32 %v1474, %v1476
    %v1480 = vpack.c.bf16 %v1478, %v1478
    %v1481 = vpack.c.bf16 %v1479, %v1479
    %v1482 = vld [vmem:[%s16] sm:$0xf]
    %v1483 = vld [vmem:[%s16 + $0x4] sm:$0xf]
    %v1484 = vld [vmem:[%s16 + $0x8] sm:$0xf]
    %v1485 = vld [vmem:[%s16 + $0xc] sm:$0xf]
    %v1486 = vld [vmem:[%s16 + $0x10] sm:$0xf]
    %v1487 = vld [vmem:[%s16 + $0x14] sm:$0xf]
    %v1488 = vld [vmem:[%s16 + $0x18] sm:$0xf]
    %v1489 = vld [vmem:[%s16 + $0x1c] sm:$0xf]
    %v1490 = vld [vmem:[%s17] sm:$0x1]
    %v1492 = vperm.slane %v1490, 0
    %v1496 = vunpack.c.l.b16 %v1480
    %v1497 = vunpack.c.l.b16 %v1481
    %v1498 = vrot.slane %v1497, 7
    %vm1499 = vcmask 1041409
    %v1500 = vsel %vm1499, %v1498, %v1496
    %v1501 = vpack.c.b16 %v1500, %v1500
    %v1510 = vunpack.c.l.b16 %v1482
    %v1511 = vunpack.c.l.b16 %v1483
    %v1512 = vunpack.c.l.b16 %v1484
    %v1513 = vunpack.c.l.b16 %v1485
    %v1514 = vunpack.c.l.b16 %v1486
    %v1515 = vunpack.c.l.b16 %v1487
    %v1516 = vunpack.c.l.b16 %v1488
    %v1517 = vunpack.c.l.b16 %v1489
    %v1518 = vpack.c.b16 %v1511, %v1510
    %v1519 = vpack.c.b16 %v1513, %v1512
    %v1520 = vpack.c.b16 %v1515, %v1514
    %v1521 = vpack.c.b16 %v1517, %v1516
    %v1527 = vsel %vm75, %v1501, 0
    %1529 = vmatpush.bf16.msra.mxu0 0
    %1530 = vmatpush.bf16.msra.mxu0 0
    %1531 = vmatpush.bf16.msra.mxu0 0
    %1532 = vmatpush.bf16.msra.mxu0 0
    %1533 = vmatpush.bf16.msra.mxu0 %v1521
    %1534 = vmatpush.bf16.msra.mxu0 %v1520
    %1535 = vmatpush.bf16.msra.mxu0 %v1519
    %1536 = vmatpush.bf16.msra.mxu0 %v1518
    %1537 = vmatmul.bf16.gmra.mxu0 %v1527
    %v1538 = vpop.f32.mrf.mxu0
    %v1539 = vadd.f32 %v1492, %v1538
    %v1540 = vpop.f32.mrf.mxu0
    %1541 = vdwg.mxu0
    %v1542 = vmax.f32 %v1539, 0.0
    %v1543 = vpack.c.bf16 %v1542, %v1542
    %v1544 = vld [vmem:[%s18] sm:$0xf]
    %v1545 = vld [vmem:[%s18 + $0x4] sm:$0xf]
    %v1546 = vld [vmem:[%s18 + $0x8] sm:$0xf]
    %v1547 = vld [vmem:[%s18 + $0xc] sm:$0xf]
    %v1548 = vld [vmem:[%s18 + $0x10] sm:$0xf]
    %v1549 = vld [vmem:[%s18 + $0x14] sm:$0xf]
    %v1550 = vld [vmem:[%s18 + $0x18] sm:$0xf]
    %v1551 = vld [vmem:[%s18 + $0x1c] sm:$0xf]
    %v1552 = vld [vmem:[%s19] sm:$0x1]
    %v1554 = vperm.slane %v1552, 0
    %v1564 = vunpack.c.l.b16 %v1544
    %v1565 = vunpack.c.l.b16 %v1545
    %v1566 = vunpack.c.l.b16 %v1546
    %v1567 = vunpack.c.l.b16 %v1547
    %v1568 = vunpack.c.l.b16 %v1548
    %v1569 = vunpack.c.l.b16 %v1549
    %v1570 = vunpack.c.l.b16 %v1550
    %v1571 = vunpack.c.l.b16 %v1551
    %v1572 = vpack.c.b16 %v1565, %v1564
    %v1573 = vpack.c.b16 %v1567, %v1566
    %v1574 = vpack.c.b16 %v1569, %v1568
    %v1575 = vpack.c.b16 %v1571, %v1570
    %v1581 = vsel %vm75, %v1543, 0
    %1583 = vmatpush.bf16.msra.mxu0 0
    %1584 = vmatpush.bf16.msra.mxu0 0
    %1585 = vmatpush.bf16.msra.mxu0 0
    %1586 = vmatpush.bf16.msra.mxu0 0
    %1587 = vmatpush.bf16.msra.mxu0 %v1575
    %1588 = vmatpush.bf16.msra.mxu0 %v1574
    %1589 = vmatpush.bf16.msra.mxu0 %v1573
    %1590 = vmatpush.bf16.msra.mxu0 %v1572
    %1591 = vmatmul.bf16.gmra.mxu0 %v1581
    %v1592 = vpop.f32.mrf.mxu0
    %v1593 = vadd.f32 %v1554, %v1592
    %v1594 = vpop.f32.mrf.mxu0
    %1595 = vdwg.mxu0
    %1596 = vst [vmem:[#allocation2] sm:$0x3] %v1593
    // Predicated region
    $region82: #{distilbert_forward.1} parent=1 // pred_check
      _
    $region83: #{distilbert_forward.1} parent=1 // pred_check_branch
      %1598 = sbr.rel (0) target = $region85
    $region84: #{distilbert_forward.1} parent=1 // pred_region
      %1600 = vsyncadd [#allocation3], 0
      %s1602 = sshll.u32 [#allocation2], 4
      %s1603 = int_to_ptr.vmem [resolvable:$true] %s1602
      %s1604 = sshll.u32 %s20, 4
      %s1605 = int_to_ptr.hbm [resolvable:$true] %s1604
      %1607 = dma.vmem_to_hbm [thread:$0]  %s1603, 32, %s1605, [#allocation3]
    $region85: #{distilbert_forward.1} parent=1 // pred_fallthru
      _
    // Predicated region
    $region86: #{distilbert_forward.1} parent=1 // pred_check
      _
    $region87: #{distilbert_forward.1} parent=1 // pred_check_branch
      %1609 = sbr.rel (0) target = $region89
    $region88: #{distilbert_forward.1} parent=1 // pred_region
      %1611 = dma.done [#allocation3], 32
    $region89: #{distilbert_forward.1} parent=1 // pred_fallthru
      _
    %1612 = vsyncpa [#allocation3], 1

</llo_original>
